<compile_context>
chip_gen: v6e
topology: v6e:2x2x1
jax: 0.10.0
libtpu: 0.0.40
codegen_flags: <defaults>
</compile_context>

<pallas_src>
import jax
import jax.numpy as jnp
import numpy as np
from jax.experimental import pallas as pl
from jax.experimental.pallas import tpu as pltpu

# ---------------- problem sizes (small, consistent with the module) ----------------
BATCH = 100                      # demo batch; wrapper tiles/pads to a multiple of the block
OBS_DIM = 24
HIDDEN = 32                      # args.hidden_size
NUM_AGENTS = 4
INTENTION_SIZE = 32              # args.intention_hidden_size (16) + args.intention_size (16)
AI = NUM_AGENTS * INTENTION_SIZE # 128
SHARE_OBS_DIM = 48               # train_share_observation_space shape
EPS = 1e-5                       # PyTorch LayerNorm default eps
MAX_BLOCK_B = 512                # cap on batch rows per grid step

# -------- packed-parameter layout: one (PACK_ROWS, 128) f32 slab --------
# rows 0..16: bias / LayerNorm vectors, one per (zero-padded) 128-lane row
V_G_OBS, V_B_OBS = 0, 1
V_B1, V_G1, V_BN1 = 2, 3, 4
V_B2, V_G2, V_BN2 = 5, 6, 7
V_BIH, V_BHH = 8, 9              # GRU biases, packed per 3 gates [r|z|n] (96 lanes each)
V_G_RNN, V_B_RNN = 10, 11
V_BI1, V_BI2 = 12, 13
V_BS, V_G_F, V_B_F = 14, 15, 16
NUM_VECS = 17
VEC_ROWS = 24                    # padded so weight matrices start sublane-aligned

# weight matrices (pre-transposed to (in, out)), stacked along sublanes, cols padded to 128
R_W1 = VEC_ROWS                  # MLP fc1          (OBS_DIM, H)      rows 24..47
R_W2 = R_W1 + OBS_DIM            # MLP fc2          (H, H)            rows 48..79
R_WIH = R_W2 + HIDDEN            # GRU W_ih packed  (H, 3H) [r|z|n]   rows 80..111
R_WHH = R_WIH + HIDDEN           # GRU W_hh packed  (H, 3H) [r|z|n]   rows 112..143
R_WI1 = R_WHH + HIDDEN           # intention fc1    (A*I, H)          rows 144..271
R_WI2 = R_WI1 + AI               # intention fc2    (H, H)            rows 272..303
R_WSX = R_WI2 + HIDDEN           # state_enc, actor-features half (H, SHARE)  rows 304..335
R_WSI = R_WSX + HIDDEN           # state_enc, intention half      (H, SHARE)  rows 336..367
PACK_ROWS = R_WSI + HIDDEN       # 368


def _layernorm(x, gamma, beta):
    # one-pass variance (E[x^2] - mu^2); mathematically equal to PyTorch LayerNorm (biased var)
    mu = jnp.mean(x, axis=-1, keepdims=True)
    ex2 = jnp.mean(x * x, axis=-1, keepdims=True)
    var = jnp.maximum(ex2 - mu * mu, 0.0)
    return (x - mu) * jax.lax.rsqrt(var + EPS) * gamma + beta


# ---------------------------------- Pallas kernel -----------------------------------
def backbone_kernel(obs_ref, h0_ref, mask_ref, intent_ref, p_ref, out_ref):
    H, S = HIDDEN, SHARE_OBS_DIM

    def vec(i, w):                      # (1, w) bias / LN row, broadcast over batch
        return p_ref[i:i + 1, 0:w]

    def mat(r0, nin, nout):             # (nin, nout) weight slab (sublane-aligned row offsets)
        return p_ref[r0:r0 + nin, 0:nout]

    def dot(a, b):
        return jnp.dot(a, b, preferred_element_type=jnp.float32)

    obs = obs_ref[...]                  # (blk, OBS_DIM)
    h0 = h0_ref[...]                    # (blk, H)
    mask = mask_ref[...]                # (blk, 1) -> lane-broadcast in-kernel
    intent = intent_ref[...]            # (blk, A*I), already multiplied by correlated_agents

    # ---- MLPBase: feature_norm + 2x (Linear -> ReLU -> LayerNorm) ----
    x = _layernorm(obs, vec(V_G_OBS, OBS_DIM), vec(V_B_OBS, OBS_DIM))
    x = jnp.maximum(dot(x, mat(R_W1, OBS_DIM, H)) + vec(V_B1, H), 0.0)
    x = _layernorm(x, vec(V_G1, H), vec(V_BN1, H))
    x = jnp.maximum(dot(x, mat(R_W2, H, H)) + vec(V_B2, H), 0.0)
    x = _layernorm(x, vec(V_G2, H), vec(V_BN2, H))

    # ---- RNNLayer: mask-gated single-step GRU (2 packed gate dots, gate order [r, z, n]) ----
    h = h0 * mask
    gi = dot(x, mat(R_WIH, H, 3 * H)) + vec(V_BIH, 3 * H)     # (blk, 96)
    gh = dot(h, mat(R_WHH, H, 3 * H)) + vec(V_BHH, 3 * H)     # (blk, 96)
    r = jax.nn.sigmoid(gi[:, 0:H] + gh[:, 0:H])
    z = jax.nn.sigmoid(gi[:, H:2 * H] + gh[:, H:2 * H])
    n = jnp.tanh(gi[:, 2 * H:3 * H] + r * gh[:, 2 * H:3 * H])
    h_new = (1.0 - z) * n + z * h
    x = _layernorm(h_new, vec(V_G_RNN, H), vec(V_B_RNN, H))

    # ---- intention_feature MLP (intention already correlated + flattened, lane-dense) ----
    f = jnp.maximum(dot(intent, mat(R_WI1, AI, H)) + vec(V_BI1, H), 0.0)
    ifeat = dot(f, mat(R_WI2, H, H)) + vec(V_BI2, H)

    # ---- state_enc on cat([x, ifeat]) via pre-split weight (no concat) + feature_norm ----
    y = dot(x, mat(R_WSX, H, S)) + dot(ifeat, mat(R_WSI, H, S)) + vec(V_BS, S)
    out_ref[...] = _layernorm(y, vec(V_G_F, S), vec(V_B_F, S))


# ------------------------------ parameter packing (init-time) ------------------------------
def pack_params(p):
    """Pack all BackBone parameters into a single (PACK_ROWS, 128) f32 slab (one DMA)."""

    def vrow(v):
        v = jnp.asarray(v, jnp.float32).reshape(1, -1)
        return jnp.pad(v, ((0, 0), (0, 128 - v.shape[1])))

    def mpad(w):
        w = jnp.asarray(w, jnp.float32)
        return jnp.pad(w, ((0, 0), (0, 128 - w.shape[1])))

    vec_rows = [
        vrow(p["g_obs"]), vrow(p["b_obs"]),
        vrow(p["b1"]), vrow(p["g1"]), vrow(p["bn1"]),
        vrow(p["b2"]), vrow(p["g2"]), vrow(p["bn2"]),
        vrow(p["bih"]), vrow(p["bhh"]),                   # packed 3-gate biases (96 lanes)
        vrow(p["g_rnn"]), vrow(p["b_rnn"]),
        vrow(p["bi1"]), vrow(p["bi2"]),
        vrow(p["bs"]), vrow(p["g_f"]), vrow(p["b_f"]),
    ]
    vec_block = jnp.concatenate(vec_rows, axis=0)                     # (17, 128)
    vec_block = jnp.pad(vec_block, ((0, VEC_ROWS - NUM_VECS), (0, 0)))

    ws = p["ws"]
    mats = [
        mpad(p["w1"]), mpad(p["w2"]),
        mpad(p["wih"]), mpad(p["whh"]),                   # (32, 96) each, gate order [r|z|n]
        mpad(p["wi1"]), mpad(p["wi2"]),
        mpad(ws[0:HIDDEN, :]), mpad(ws[HIDDEN:2 * HIDDEN, :]),
    ]
    packed = jnp.concatenate([vec_block] + mats, axis=0)
    assert packed.shape == (PACK_ROWS, 128)
    return packed


# ------------------------------------ wrapper ---------------------------------------
def _choose_block(b, max_block=MAX_BLOCK_B):
    """Batch tile: <= max_block rows, multiple of 8, and >= 2 blocks when the batch allows
    (keeps both v7x TensorCores busy) while keeping batch-padding waste small."""
    target = -(-b // 2)                  # ceil(b / 2)
    blk = min(max_block, max(8, target))
    return -(-blk // 8) * 8              # round up to a multiple of 8


def backbone_forward(obs, rnn_states, masks, intention, correlated_agents, packed_params):
    b = obs.shape[0]
    f32 = jnp.float32

    obs = obs.astype(f32)
    h0 = rnn_states[:, 0, :].astype(f32)                              # recurrent_N = 1
    masks = masks.astype(f32)                                         # (b, 1)
    # Intention_correlation's detach + per-agent multiply, fused into the flatten (forward-only).
    intent_flat = (intention.astype(f32) *
                   correlated_agents.astype(f32)[:, :, None]).reshape(b, AI)

    blk = _choose_block(b)
    n_blocks = pl.cdiv(b, blk)
    bp = n_blocks * blk
    if bp != b:
        pad = ((0, bp - b), (0, 0))
        obs = jnp.pad(obs, pad)
        h0 = jnp.pad(h0, pad)
        masks = jnp.pad(masks, pad)
        intent_flat = jnp.pad(intent_flat, pad)

    out = pl.pallas_call(
        backbone_kernel,
        out_shape=jax.ShapeDtypeStruct((bp, SHARE_OBS_DIM), f32),
        grid=(n_blocks,),
        in_specs=[
            pl.BlockSpec((blk, OBS_DIM), lambda i: (i, 0)),           # obs
            pl.BlockSpec((blk, HIDDEN), lambda i: (i, 0)),            # rnn hidden state
            pl.BlockSpec((blk, 1), lambda i: (i, 0)),                 # mask (1 lane)
            pl.BlockSpec((blk, AI), lambda i: (i, 0)),                # correlated intention
            pl.BlockSpec((PACK_ROWS, 128), lambda i: (0, 0)),         # resident parameter slab
        ],
        out_specs=pl.BlockSpec((blk, SHARE_OBS_DIM), lambda i: (i, 0)),
        compiler_params=pltpu.CompilerParams(dimension_semantics=("parallel",)),
    )(obs, h0, masks, intent_flat, packed_params)
    return out[:b]


# --------------------------- deterministic parameter init ---------------------------
def make_params(key):
    def linear(key, fan_in, fan_out):
        kw, kb = jax.random.split(key)
        w = jax.random.normal(kw, (fan_in, fan_out), jnp.float32) / np.sqrt(fan_in)
        b = jax.random.normal(kb, (1, fan_out), jnp.float32) * 0.01
        return w, b

    keys = jax.random.split(key, 8)
    p = {}
    # LayerNorms: PyTorch default affine params (weight=1, bias=0)
    p["g_obs"] = jnp.ones((1, OBS_DIM), jnp.float32)
    p["b_obs"] = jnp.zeros((1, OBS_DIM), jnp.float32)
    p["g1"], p["bn1"] = jnp.ones((1, HIDDEN), jnp.float32), jnp.zeros((1, HIDDEN), jnp.float32)
    p["g2"], p["bn2"] = jnp.ones((1, HIDDEN), jnp.float32), jnp.zeros((1, HIDDEN), jnp.float32)
    p["g_rnn"], p["b_rnn"] = jnp.ones((1, HIDDEN), jnp.float32), jnp.zeros((1, HIDDEN), jnp.float32)
    p["g_f"], p["b_f"] = (jnp.ones((1, SHARE_OBS_DIM), jnp.float32),
                          jnp.zeros((1, SHARE_OBS_DIM), jnp.float32))
    # MLPBase linears (pre-transposed to (in, out))
    p["w1"], p["b1"] = linear(keys[0], OBS_DIM, HIDDEN)
    p["w2"], p["b2"] = linear(keys[1], HIDDEN, HIDDEN)
    # GRU weights, pre-transposed to (in, 3H); gate order [r, z, n]
    p["wih"], p["bih"] = linear(keys[2], HIDDEN, 3 * HIDDEN)
    p["whh"], p["bhh"] = linear(keys[3], HIDDEN, 3 * HIDDEN)
    # intention_feature
    p["wi1"], p["bi1"] = linear(keys[4], AI, HIDDEN)
    p["wi2"], p["bi2"] = linear(keys[5], HIDDEN, HIDDEN)
    # state_enc
    p["ws"], p["bs"] = linear(keys[6], 2 * HIDDEN, SHARE_OBS_DIM)
    return p


# -------------------------------- pure-JAX reference --------------------------------
def reference_forward(obs, rnn_states, masks, intention, correlated_agents, p):
    x = _layernorm(obs, p["g_obs"], p["b_obs"])
    x = jax.nn.relu(x @ p["w1"] + p["b1"])
    x = _layernorm(x, p["g1"], p["bn1"])
    x = jax.nn.relu(x @ p["w2"] + p["b2"])
    x = _layernorm(x, p["g2"], p["bn2"])

    h = rnn_states[:, 0, :] * masks
    gi = x @ p["wih"] + p["bih"]
    gh = h @ p["whh"] + p["bhh"]
    H = HIDDEN
    r = jax.nn.sigmoid(gi[:, :H] + gh[:, :H])
    z = jax.nn.sigmoid(gi[:, H:2 * H] + gh[:, H:2 * H])
    n = jnp.tanh(gi[:, 2 * H:] + r * gh[:, 2 * H:])
    h_new = (1.0 - z) * n + z * h
    x = _layernorm(h_new, p["g_rnn"], p["b_rnn"])

    # Intention_correlation (permute/multiply/permute/flatten in torch)
    final = intention * correlated_agents[:, :, None]
    flat = final.reshape(final.shape[0], -1)
    ifeat = jax.nn.relu(flat @ p["wi1"] + p["bi1"]) @ p["wi2"] + p["bi2"]

    cat = jnp.concatenate([x, ifeat], axis=-1)
    y = cat @ p["ws"] + p["bs"]
    return _layernorm(y, p["g_f"], p["b_f"])


# --------------------------------------- main ----------------------------------------
if __name__ == "__main__":
    key = jax.random.PRNGKey(0)
    k_obs, k_rnn, k_mask, k_int, k_corr, k_par = jax.random.split(key, 6)

    obs = jax.random.normal(k_obs, (BATCH, OBS_DIM), jnp.float32)
    rnn_states = jax.random.normal(k_rnn, (BATCH, 1, HIDDEN), jnp.float32)
    masks = (jax.random.uniform(k_mask, (BATCH, 1)) > 0.3).astype(jnp.float32)
    intention = jax.random.normal(k_int, (BATCH, NUM_AGENTS, INTENTION_SIZE), jnp.float32)
    correlated_agents = (jax.random.uniform(k_corr, (BATCH, NUM_AGENTS)) > 0.5).astype(jnp.float32)

    params = make_params(k_par)
    packed_params = pack_params(params)      # built once at init time (single VMEM slab)

    out = backbone_forward(obs, rnn_states, masks, intention, correlated_agents, packed_params)
    out = jax.block_until_ready(out)

    ref = reference_forward(obs, rnn_states, masks, intention, correlated_agents, params)
    np.testing.assert_allclose(np.asarray(out), np.asarray(ref), rtol=2e-3, atol=2e-3)

    # TODO(synk): CNNBase branch (3-D obs) not implemented; this config uses the MLPBase path.
    # TODO(synk): optional bf16 activation inputs (halves HBM bytes) would need the 2e-3
    #             LayerNorm tolerance relaxed; kept f32 here.
    print("KERNEL_OK")
</pallas_src>

<mosaic_0001>
module attributes {stable_mosaic.version = 11 : i64} {
  func.func @backbone_kernel(%arg0: i32, %arg1: memref<56x24xf32, #tpu.memory_space<vmem>>, %arg2: memref<56x32xf32, #tpu.memory_space<vmem>>, %arg3: memref<56x1xf32, #tpu.memory_space<vmem>>, %arg4: memref<56x128xf32, #tpu.memory_space<vmem>>, %arg5: memref<368x128xf32, #tpu.memory_space<vmem>>, %arg6: memref<56x48xf32, #tpu.memory_space<vmem>>) attributes {dimension_semantics = [#tpu.dimension_semantics<parallel>], iteration_bounds = array<i64: 2>, scalar_prefetch = 0 : i64, scratch_operands = 0 : i64, tpu.core_type = #tpu.core_type<tc>, window_params = [{transform_indices = @transform_0, window_bounds = array<i64: 56, 24>}, {transform_indices = @transform_1, window_bounds = array<i64: 56, 32>}, {transform_indices = @transform_2, window_bounds = array<i64: 56, 1>}, {transform_indices = @transform_3, window_bounds = array<i64: 56, 128>}, {pipeline_mode = #tpu.pipeline_mode<synchronous>, transform_indices = @transform_4, window_bounds = array<i64: 368, 128>}, {transform_indices = @transform_5, window_bounds = array<i64: 56, 48>}]} {
    %c0 = arith.constant 0 : index
    %c0_0 = arith.constant 0 : index
    %0 = vector.load %arg1[%c0, %c0_0] : memref<56x24xf32, #tpu.memory_space<vmem>>, vector<56x24xf32>
    %c0_1 = arith.constant 0 : index
    %c0_2 = arith.constant 0 : index
    %1 = vector.load %arg2[%c0_1, %c0_2] : memref<56x32xf32, #tpu.memory_space<vmem>>, vector<56x32xf32>
    %c0_3 = arith.constant 0 : index
    %c0_4 = arith.constant 0 : index
    %2 = vector.load %arg3[%c0_3, %c0_4] : memref<56x1xf32, #tpu.memory_space<vmem>>, vector<56x1xf32>
    %c0_5 = arith.constant 0 : index
    %c0_6 = arith.constant 0 : index
    %3 = vector.load %arg4[%c0_5, %c0_6] : memref<56x128xf32, #tpu.memory_space<vmem>>, vector<56x128xf32>
    %c0_7 = arith.constant 0 : index
    %c0_8 = arith.constant 0 : index
    %4 = vector.load %arg5[%c0_7, %c0_8] : memref<368x128xf32, #tpu.memory_space<vmem>>, vector<1x24xf32>
    %c1 = arith.constant 1 : index
    %c0_9 = arith.constant 0 : index
    %5 = vector.load %arg5[%c1, %c0_9] : memref<368x128xf32, #tpu.memory_space<vmem>>, vector<1x24xf32>
    %cst = arith.constant dense<0.000000e+00> : vector<56xf32>
    %6 = vector.multi_reduction <add>, %0, %cst [1] : vector<56x24xf32> to vector<56xf32>
    %7 = vector.shape_cast %6 : vector<56xf32> to vector<56x1xf32>
    %cst_10 = arith.constant 2.400000e+01 : f32
    %8 = vector.broadcast %cst_10 : f32 to vector<56x1xf32>
    %9 = arith.divf %7, %8 : vector<56x1xf32>
    %10 = arith.mulf %0, %0 : vector<56x24xf32>
    %cst_11 = arith.constant dense<0.000000e+00> : vector<56xf32>
    %11 = vector.multi_reduction <add>, %10, %cst_11 [1] : vector<56x24xf32> to vector<56xf32>
    %12 = vector.shape_cast %11 : vector<56xf32> to vector<56x1xf32>
    %cst_12 = arith.constant 2.400000e+01 : f32
    %13 = vector.broadcast %cst_12 : f32 to vector<56x1xf32>
    %14 = arith.divf %12, %13 : vector<56x1xf32>
    %15 = arith.mulf %9, %9 : vector<56x1xf32>
    %16 = arith.subf %14, %15 : vector<56x1xf32>
    %cst_13 = arith.constant 0.000000e+00 : f32
    %17 = vector.broadcast %cst_13 : f32 to vector<56x1xf32>
    %18 = arith.maximumf %16, %17 : vector<56x1xf32>
    %19 = vector.broadcast %9 : vector<56x1xf32> to vector<56x24xf32>
    %20 = arith.subf %0, %19 : vector<56x24xf32>
    %cst_14 = arith.constant 9.99999974E-6 : f32
    %21 = vector.broadcast %cst_14 : f32 to vector<56x1xf32>
    %22 = arith.addf %18, %21 : vector<56x1xf32>
    %23 = math.rsqrt %22 : vector<56x1xf32>
    %24 = vector.broadcast %23 : vector<56x1xf32> to vector<56x24xf32>
    %25 = arith.mulf %20, %24 : vector<56x24xf32>
    %26 = vector.broadcast %4 : vector<1x24xf32> to vector<56x24xf32>
    %27 = arith.mulf %25, %26 : vector<56x24xf32>
    %28 = vector.broadcast %5 : vector<1x24xf32> to vector<56x24xf32>
    %29 = arith.addf %27, %28 : vector<56x24xf32>
    %c24 = arith.constant 24 : index
    %c0_15 = arith.constant 0 : index
    %30 = vector.load %arg5[%c24, %c0_15] : memref<368x128xf32, #tpu.memory_space<vmem>>, vector<24x32xf32>
    %cst_16 = arith.constant dense<0.000000e+00> : vector<56x32xf32>
    %31 = tpu.matmul %29, %30, %cst_16 {dimension_numbers = #tpu.dot_dimension_numbers<[1], [0], [0], [1], [0, 0, 1, 1], [], []>} : vector<56x24xf32>, vector<24x32xf32>, vector<56x32xf32> -> vector<56x32xf32>
    %c2 = arith.constant 2 : index
    %c0_17 = arith.constant 0 : index
    %32 = vector.load %arg5[%c2, %c0_17] : memref<368x128xf32, #tpu.memory_space<vmem>>, vector<1x32xf32>
    %33 = vector.broadcast %32 : vector<1x32xf32> to vector<56x32xf32>
    %34 = arith.addf %31, %33 : vector<56x32xf32>
    %cst_18 = arith.constant 0.000000e+00 : f32
    %35 = vector.broadcast %cst_18 : f32 to vector<56x32xf32>
    %36 = arith.maximumf %34, %35 : vector<56x32xf32>
    %c3 = arith.constant 3 : index
    %c0_19 = arith.constant 0 : index
    %37 = vector.load %arg5[%c3, %c0_19] : memref<368x128xf32, #tpu.memory_space<vmem>>, vector<1x32xf32>
    %c4 = arith.constant 4 : index
    %c0_20 = arith.constant 0 : index
    %38 = vector.load %arg5[%c4, %c0_20] : memref<368x128xf32, #tpu.memory_space<vmem>>, vector<1x32xf32>
    %cst_21 = arith.constant dense<0.000000e+00> : vector<56xf32>
    %39 = vector.multi_reduction <add>, %36, %cst_21 [1] : vector<56x32xf32> to vector<56xf32>
    %40 = vector.shape_cast %39 : vector<56xf32> to vector<56x1xf32>
    %cst_22 = arith.constant 3.200000e+01 : f32
    %41 = vector.broadcast %cst_22 : f32 to vector<56x1xf32>
    %42 = arith.divf %40, %41 : vector<56x1xf32>
    %43 = arith.mulf %36, %36 : vector<56x32xf32>
    %cst_23 = arith.constant dense<0.000000e+00> : vector<56xf32>
    %44 = vector.multi_reduction <add>, %43, %cst_23 [1] : vector<56x32xf32> to vector<56xf32>
    %45 = vector.shape_cast %44 : vector<56xf32> to vector<56x1xf32>
    %cst_24 = arith.constant 3.200000e+01 : f32
    %46 = vector.broadcast %cst_24 : f32 to vector<56x1xf32>
    %47 = arith.divf %45, %46 : vector<56x1xf32>
    %48 = arith.mulf %42, %42 : vector<56x1xf32>
    %49 = arith.subf %47, %48 : vector<56x1xf32>
    %cst_25 = arith.constant 0.000000e+00 : f32
    %50 = vector.broadcast %cst_25 : f32 to vector<56x1xf32>
    %51 = arith.maximumf %49, %50 : vector<56x1xf32>
    %52 = vector.broadcast %42 : vector<56x1xf32> to vector<56x32xf32>
    %53 = arith.subf %36, %52 : vector<56x32xf32>
    %cst_26 = arith.constant 9.99999974E-6 : f32
    %54 = vector.broadcast %cst_26 : f32 to vector<56x1xf32>
    %55 = arith.addf %51, %54 : vector<56x1xf32>
    %56 = math.rsqrt %55 : vector<56x1xf32>
    %57 = vector.broadcast %56 : vector<56x1xf32> to vector<56x32xf32>
    %58 = arith.mulf %53, %57 : vector<56x32xf32>
    %59 = vector.broadcast %37 : vector<1x32xf32> to vector<56x32xf32>
    %60 = arith.mulf %58, %59 : vector<56x32xf32>
    %61 = vector.broadcast %38 : vector<1x32xf32> to vector<56x32xf32>
    %62 = arith.addf %60, %61 : vector<56x32xf32>
    %c48 = arith.constant 48 : index
    %c0_27 = arith.constant 0 : index
    %63 = vector.load %arg5[%c48, %c0_27] : memref<368x128xf32, #tpu.memory_space<vmem>>, vector<32x32xf32>
    %cst_28 = arith.constant dense<0.000000e+00> : vector<56x32xf32>
    %64 = tpu.matmul %62, %63, %cst_28 {dimension_numbers = #tpu.dot_dimension_numbers<[1], [0], [0], [1], [0, 0, 1, 1], [], []>} : vector<56x32xf32>, vector<32x32xf32>, vector<56x32xf32> -> vector<56x32xf32>
    %c5 = arith.constant 5 : index
    %c0_29 = arith.constant 0 : index
    %65 = vector.load %arg5[%c5, %c0_29] : memref<368x128xf32, #tpu.memory_space<vmem>>, vector<1x32xf32>
    %66 = vector.broadcast %65 : vector<1x32xf32> to vector<56x32xf32>
    %67 = arith.addf %64, %66 : vector<56x32xf32>
    %cst_30 = arith.constant 0.000000e+00 : f32
    %68 = vector.broadcast %cst_30 : f32 to vector<56x32xf32>
    %69 = arith.maximumf %67, %68 : vector<56x32xf32>
    %c6 = arith.constant 6 : index
    %c0_31 = arith.constant 0 : index
    %70 = vector.load %arg5[%c6, %c0_31] : memref<368x128xf32, #tpu.memory_space<vmem>>, vector<1x32xf32>
    %c7 = arith.constant 7 : index
    %c0_32 = arith.constant 0 : index
    %71 = vector.load %arg5[%c7, %c0_32] : memref<368x128xf32, #tpu.memory_space<vmem>>, vector<1x32xf32>
    %cst_33 = arith.constant dense<0.000000e+00> : vector<56xf32>
    %72 = vector.multi_reduction <add>, %69, %cst_33 [1] : vector<56x32xf32> to vector<56xf32>
    %73 = vector.shape_cast %72 : vector<56xf32> to vector<56x1xf32>
    %cst_34 = arith.constant 3.200000e+01 : f32
    %74 = vector.broadcast %cst_34 : f32 to vector<56x1xf32>
    %75 = arith.divf %73, %74 : vector<56x1xf32>
    %76 = arith.mulf %69, %69 : vector<56x32xf32>
    %cst_35 = arith.constant dense<0.000000e+00> : vector<56xf32>
    %77 = vector.multi_reduction <add>, %76, %cst_35 [1] : vector<56x32xf32> to vector<56xf32>
    %78 = vector.shape_cast %77 : vector<56xf32> to vector<56x1xf32>
    %cst_36 = arith.constant 3.200000e+01 : f32
    %79 = vector.broadcast %cst_36 : f32 to vector<56x1xf32>
    %80 = arith.divf %78, %79 : vector<56x1xf32>
    %81 = arith.mulf %75, %75 : vector<56x1xf32>
    %82 = arith.subf %80, %81 : vector<56x1xf32>
    %cst_37 = arith.constant 0.000000e+00 : f32
    %83 = vector.broadcast %cst_37 : f32 to vector<56x1xf32>
    %84 = arith.maximumf %82, %83 : vector<56x1xf32>
    %85 = vector.broadcast %75 : vector<56x1xf32> to vector<56x32xf32>
    %86 = arith.subf %69, %85 : vector<56x32xf32>
    %cst_38 = arith.constant 9.99999974E-6 : f32
    %87 = vector.broadcast %cst_38 : f32 to vector<56x1xf32>
    %88 = arith.addf %84, %87 : vector<56x1xf32>
    %89 = math.rsqrt %88 : vector<56x1xf32>
    %90 = vector.broadcast %89 : vector<56x1xf32> to vector<56x32xf32>
    %91 = arith.mulf %86, %90 : vector<56x32xf32>
    %92 = vector.broadcast %70 : vector<1x32xf32> to vector<56x32xf32>
    %93 = arith.mulf %91, %92 : vector<56x32xf32>
    %94 = vector.broadcast %71 : vector<1x32xf32> to vector<56x32xf32>
    %95 = arith.addf %93, %94 : vector<56x32xf32>
    %96 = vector.broadcast %2 : vector<56x1xf32> to vector<56x32xf32>
    %97 = arith.mulf %1, %96 : vector<56x32xf32>
    %c80 = arith.constant 80 : index
    %c0_39 = arith.constant 0 : index
    %98 = vector.load %arg5[%c80, %c0_39] : memref<368x128xf32, #tpu.memory_space<vmem>>, vector<32x96xf32>
    %cst_40 = arith.constant dense<0.000000e+00> : vector<56x96xf32>
    %99 = tpu.matmul %95, %98, %cst_40 {dimension_numbers = #tpu.dot_dimension_numbers<[1], [0], [0], [1], [0, 0, 1, 1], [], []>} : vector<56x32xf32>, vector<32x96xf32>, vector<56x96xf32> -> vector<56x96xf32>
    %c8 = arith.constant 8 : index
    %c0_41 = arith.constant 0 : index
    %100 = vector.load %arg5[%c8, %c0_41] : memref<368x128xf32, #tpu.memory_space<vmem>>, vector<1x96xf32>
    %101 = vector.broadcast %100 : vector<1x96xf32> to vector<56x96xf32>
    %102 = arith.addf %99, %101 : vector<56x96xf32>
    %c112 = arith.constant 112 : index
    %c0_42 = arith.constant 0 : index
    %103 = vector.load %arg5[%c112, %c0_42] : memref<368x128xf32, #tpu.memory_space<vmem>>, vector<32x96xf32>
    %cst_43 = arith.constant dense<0.000000e+00> : vector<56x96xf32>
    %104 = tpu.matmul %97, %103, %cst_43 {dimension_numbers = #tpu.dot_dimension_numbers<[1], [0], [0], [1], [0, 0, 1, 1], [], []>} : vector<56x32xf32>, vector<32x96xf32>, vector<56x96xf32> -> vector<56x96xf32>
    %c9 = arith.constant 9 : index
    %c0_44 = arith.constant 0 : index
    %105 = vector.load %arg5[%c9, %c0_44] : memref<368x128xf32, #tpu.memory_space<vmem>>, vector<1x96xf32>
    %106 = vector.broadcast %105 : vector<1x96xf32> to vector<56x96xf32>
    %107 = arith.addf %104, %106 : vector<56x96xf32>
    %108 = vector.extract_strided_slice %102 {offsets = [0, 0], sizes = [56, 32], strides = [1, 1]} : vector<56x96xf32> to vector<56x32xf32>
    %109 = vector.extract_strided_slice %107 {offsets = [0, 0], sizes = [56, 32], strides = [1, 1]} : vector<56x96xf32> to vector<56x32xf32>
    %110 = arith.addf %108, %109 : vector<56x32xf32>
    %111 = arith.negf %110 : vector<56x32xf32>
    %112 = math.exp %111 : vector<56x32xf32>
    %cst_45 = arith.constant 1.000000e+00 : f32
    %113 = vector.broadcast %cst_45 : f32 to vector<56x32xf32>
    %114 = arith.addf %113, %112 : vector<56x32xf32>
    %115 = arith.divf %113, %114 : vector<56x32xf32>
    %116 = vector.extract_strided_slice %102 {offsets = [0, 32], sizes = [56, 32], strides = [1, 1]} : vector<56x96xf32> to vector<56x32xf32>
    %117 = vector.extract_strided_slice %107 {offsets = [0, 32], sizes = [56, 32], strides = [1, 1]} : vector<56x96xf32> to vector<56x32xf32>
    %118 = arith.addf %116, %117 : vector<56x32xf32>
    %119 = arith.negf %118 : vector<56x32xf32>
    %120 = math.exp %119 : vector<56x32xf32>
    %cst_46 = arith.constant 1.000000e+00 : f32
    %121 = vector.broadcast %cst_46 : f32 to vector<56x32xf32>
    %122 = arith.addf %121, %120 : vector<56x32xf32>
    %123 = arith.divf %121, %122 : vector<56x32xf32>
    %124 = vector.extract_strided_slice %102 {offsets = [0, 64], sizes = [56, 32], strides = [1, 1]} : vector<56x96xf32> to vector<56x32xf32>
    %125 = vector.extract_strided_slice %107 {offsets = [0, 64], sizes = [56, 32], strides = [1, 1]} : vector<56x96xf32> to vector<56x32xf32>
    %126 = arith.mulf %115, %125 : vector<56x32xf32>
    %127 = arith.addf %124, %126 : vector<56x32xf32>
    %128 = math.tanh %127 : vector<56x32xf32>
    %cst_47 = arith.constant 1.000000e+00 : f32
    %129 = vector.broadcast %cst_47 : f32 to vector<56x32xf32>
    %130 = arith.subf %129, %123 : vector<56x32xf32>
    %131 = arith.mulf %130, %128 : vector<56x32xf32>
    %132 = arith.mulf %123, %97 : vector<56x32xf32>
    %133 = arith.addf %131, %132 : vector<56x32xf32>
    %c10 = arith.constant 10 : index
    %c0_48 = arith.constant 0 : index
    %134 = vector.load %arg5[%c10, %c0_48] : memref<368x128xf32, #tpu.memory_space<vmem>>, vector<1x32xf32>
    %c11 = arith.constant 11 : index
    %c0_49 = arith.constant 0 : index
    %135 = vector.load %arg5[%c11, %c0_49] : memref<368x128xf32, #tpu.memory_space<vmem>>, vector<1x32xf32>
    %cst_50 = arith.constant dense<0.000000e+00> : vector<56xf32>
    %136 = vector.multi_reduction <add>, %133, %cst_50 [1] : vector<56x32xf32> to vector<56xf32>
    %137 = vector.shape_cast %136 : vector<56xf32> to vector<56x1xf32>
    %cst_51 = arith.constant 3.200000e+01 : f32
    %138 = vector.broadcast %cst_51 : f32 to vector<56x1xf32>
    %139 = arith.divf %137, %138 : vector<56x1xf32>
    %140 = arith.mulf %133, %133 : vector<56x32xf32>
    %cst_52 = arith.constant dense<0.000000e+00> : vector<56xf32>
    %141 = vector.multi_reduction <add>, %140, %cst_52 [1] : vector<56x32xf32> to vector<56xf32>
    %142 = vector.shape_cast %141 : vector<56xf32> to vector<56x1xf32>
    %cst_53 = arith.constant 3.200000e+01 : f32
    %143 = vector.broadcast %cst_53 : f32 to vector<56x1xf32>
    %144 = arith.divf %142, %143 : vector<56x1xf32>
    %145 = arith.mulf %139, %139 : vector<56x1xf32>
    %146 = arith.subf %144, %145 : vector<56x1xf32>
    %cst_54 = arith.constant 0.000000e+00 : f32
    %147 = vector.broadcast %cst_54 : f32 to vector<56x1xf32>
    %148 = arith.maximumf %146, %147 : vector<56x1xf32>
    %149 = vector.broadcast %139 : vector<56x1xf32> to vector<56x32xf32>
    %150 = arith.subf %133, %149 : vector<56x32xf32>
    %cst_55 = arith.constant 9.99999974E-6 : f32
    %151 = vector.broadcast %cst_55 : f32 to vector<56x1xf32>
    %152 = arith.addf %148, %151 : vector<56x1xf32>
    %153 = math.rsqrt %152 : vector<56x1xf32>
    %154 = vector.broadcast %153 : vector<56x1xf32> to vector<56x32xf32>
    %155 = arith.mulf %150, %154 : vector<56x32xf32>
    %156 = vector.broadcast %134 : vector<1x32xf32> to vector<56x32xf32>
    %157 = arith.mulf %155, %156 : vector<56x32xf32>
    %158 = vector.broadcast %135 : vector<1x32xf32> to vector<56x32xf32>
    %159 = arith.addf %157, %158 : vector<56x32xf32>
    %c144 = arith.constant 144 : index
    %c0_56 = arith.constant 0 : index
    %160 = vector.load %arg5[%c144, %c0_56] : memref<368x128xf32, #tpu.memory_space<vmem>>, vector<128x32xf32>
    %cst_57 = arith.constant dense<0.000000e+00> : vector<56x32xf32>
    %161 = tpu.matmul %3, %160, %cst_57 {dimension_numbers = #tpu.dot_dimension_numbers<[1], [0], [0], [1], [0, 0, 1, 1], [], []>} : vector<56x128xf32>, vector<128x32xf32>, vector<56x32xf32> -> vector<56x32xf32>
    %c12 = arith.constant 12 : index
    %c0_58 = arith.constant 0 : index
    %162 = vector.load %arg5[%c12, %c0_58] : memref<368x128xf32, #tpu.memory_space<vmem>>, vector<1x32xf32>
    %163 = vector.broadcast %162 : vector<1x32xf32> to vector<56x32xf32>
    %164 = arith.addf %161, %163 : vector<56x32xf32>
    %cst_59 = arith.constant 0.000000e+00 : f32
    %165 = vector.broadcast %cst_59 : f32 to vector<56x32xf32>
    %166 = arith.maximumf %164, %165 : vector<56x32xf32>
    %c272 = arith.constant 272 : index
    %c0_60 = arith.constant 0 : index
    %167 = vector.load %arg5[%c272, %c0_60] : memref<368x128xf32, #tpu.memory_space<vmem>>, vector<32x32xf32>
    %cst_61 = arith.constant dense<0.000000e+00> : vector<56x32xf32>
    %168 = tpu.matmul %166, %167, %cst_61 {dimension_numbers = #tpu.dot_dimension_numbers<[1], [0], [0], [1], [0, 0, 1, 1], [], []>} : vector<56x32xf32>, vector<32x32xf32>, vector<56x32xf32> -> vector<56x32xf32>
    %c13 = arith.constant 13 : index
    %c0_62 = arith.constant 0 : index
    %169 = vector.load %arg5[%c13, %c0_62] : memref<368x128xf32, #tpu.memory_space<vmem>>, vector<1x32xf32>
    %170 = vector.broadcast %169 : vector<1x32xf32> to vector<56x32xf32>
    %171 = arith.addf %168, %170 : vector<56x32xf32>
    %c304 = arith.constant 304 : index
    %c0_63 = arith.constant 0 : index
    %172 = vector.load %arg5[%c304, %c0_63] : memref<368x128xf32, #tpu.memory_space<vmem>>, vector<32x48xf32>
    %cst_64 = arith.constant dense<0.000000e+00> : vector<56x48xf32>
    %173 = tpu.matmul %159, %172, %cst_64 {dimension_numbers = #tpu.dot_dimension_numbers<[1], [0], [0], [1], [0, 0, 1, 1], [], []>} : vector<56x32xf32>, vector<32x48xf32>, vector<56x48xf32> -> vector<56x48xf32>
    %c336 = arith.constant 336 : index
    %c0_65 = arith.constant 0 : index
    %174 = vector.load %arg5[%c336, %c0_65] : memref<368x128xf32, #tpu.memory_space<vmem>>, vector<32x48xf32>
    %cst_66 = arith.constant dense<0.000000e+00> : vector<56x48xf32>
    %175 = tpu.matmul %171, %174, %cst_66 {dimension_numbers = #tpu.dot_dimension_numbers<[1], [0], [0], [1], [0, 0, 1, 1], [], []>} : vector<56x32xf32>, vector<32x48xf32>, vector<56x48xf32> -> vector<56x48xf32>
    %176 = arith.addf %173, %175 : vector<56x48xf32>
    %c14 = arith.constant 14 : index
    %c0_67 = arith.constant 0 : index
    %177 = vector.load %arg5[%c14, %c0_67] : memref<368x128xf32, #tpu.memory_space<vmem>>, vector<1x48xf32>
    %178 = vector.broadcast %177 : vector<1x48xf32> to vector<56x48xf32>
    %179 = arith.addf %176, %178 : vector<56x48xf32>
    %c15 = arith.constant 15 : index
    %c0_68 = arith.constant 0 : index
    %180 = vector.load %arg5[%c15, %c0_68] : memref<368x128xf32, #tpu.memory_space<vmem>>, vector<1x48xf32>
    %c16 = arith.constant 16 : index
    %c0_69 = arith.constant 0 : index
    %181 = vector.load %arg5[%c16, %c0_69] : memref<368x128xf32, #tpu.memory_space<vmem>>, vector<1x48xf32>
    %cst_70 = arith.constant dense<0.000000e+00> : vector<56xf32>
    %182 = vector.multi_reduction <add>, %179, %cst_70 [1] : vector<56x48xf32> to vector<56xf32>
    %183 = vector.shape_cast %182 : vector<56xf32> to vector<56x1xf32>
    %cst_71 = arith.constant 4.800000e+01 : f32
    %184 = vector.broadcast %cst_71 : f32 to vector<56x1xf32>
    %185 = arith.divf %183, %184 : vector<56x1xf32>
    %186 = arith.mulf %179, %179 : vector<56x48xf32>
    %cst_72 = arith.constant dense<0.000000e+00> : vector<56xf32>
    %187 = vector.multi_reduction <add>, %186, %cst_72 [1] : vector<56x48xf32> to vector<56xf32>
    %188 = vector.shape_cast %187 : vector<56xf32> to vector<56x1xf32>
    %cst_73 = arith.constant 4.800000e+01 : f32
    %189 = vector.broadcast %cst_73 : f32 to vector<56x1xf32>
    %190 = arith.divf %188, %189 : vector<56x1xf32>
    %191 = arith.mulf %185, %185 : vector<56x1xf32>
    %192 = arith.subf %190, %191 : vector<56x1xf32>
    %cst_74 = arith.constant 0.000000e+00 : f32
    %193 = vector.broadcast %cst_74 : f32 to vector<56x1xf32>
    %194 = arith.maximumf %192, %193 : vector<56x1xf32>
    %195 = vector.broadcast %185 : vector<56x1xf32> to vector<56x48xf32>
    %196 = arith.subf %179, %195 : vector<56x48xf32>
    %cst_75 = arith.constant 9.99999974E-6 : f32
    %197 = vector.broadcast %cst_75 : f32 to vector<56x1xf32>
    %198 = arith.addf %194, %197 : vector<56x1xf32>
    %199 = math.rsqrt %198 : vector<56x1xf32>
    %200 = vector.broadcast %199 : vector<56x1xf32> to vector<56x48xf32>
    %201 = arith.mulf %196, %200 : vector<56x48xf32>
    %202 = vector.broadcast %180 : vector<1x48xf32> to vector<56x48xf32>
    %203 = arith.mulf %201, %202 : vector<56x48xf32>
    %204 = vector.broadcast %181 : vector<1x48xf32> to vector<56x48xf32>
    %205 = arith.addf %203, %204 : vector<56x48xf32>
    %c0_76 = arith.constant 0 : index
    %c0_77 = arith.constant 0 : index
    %206 = vector.load %arg6[%c0_76, %c0_77] : memref<56x48xf32, #tpu.memory_space<vmem>>, vector<56x48xf32>
    tpu.vector_store %arg6[%c0_76, %c0_77], %205 {strides = array<i32>} : memref<56x48xf32, #tpu.memory_space<vmem>>, vector<56x48xf32>,
    return
  }
  func.func @transform_0(%arg0: i32) -> (i32, i32) {
    %c0_i32 = arith.constant 0 : i32
    %c0_i32_0 = arith.constant 0 : i32
    return %arg0, %c0_i32 : i32, i32
  }
  func.func @transform_1(%arg0: i32) -> (i32, i32) {
    %c0_i32 = arith.constant 0 : i32
    %c0_i32_0 = arith.constant 0 : i32
    return %arg0, %c0_i32 : i32, i32
  }
  func.func @transform_2(%arg0: i32) -> (i32, i32) {
    %c0_i32 = arith.constant 0 : i32
    %c0_i32_0 = arith.constant 0 : i32
    return %arg0, %c0_i32 : i32, i32
  }
  func.func @transform_3(%arg0: i32) -> (i32, i32) {
    %c0_i32 = arith.constant 0 : i32
    %c0_i32_0 = arith.constant 0 : i32
    return %arg0, %c0_i32 : i32, i32
  }
  func.func @transform_4(%arg0: i32) -> (i32, i32) {
    %c0_i32 = arith.constant 0 : i32
    %c0_i32_0 = arith.constant 0 : i32
    %c0_i32_1 = arith.constant 0 : i32
    return %c0_i32, %c0_i32_0 : i32, i32
  }
  func.func @transform_5(%arg0: i32) -> (i32, i32) {
    %c0_i32 = arith.constant 0 : i32
    %c0_i32_0 = arith.constant 0 : i32
    return %arg0, %c0_i32 : i32, i32
  }
}

</mosaic_0001>

<llo_original>
// kernel: tpu_custom_call.1
$region0: #{tpu_custom_call.1}
  #allocation0 [shape = 'u32[]', space=smem, size = 0x4, offset = 0x4, fixed_abs, tag = 'smem constant byte address 0x4 - core index']
  #allocation1 [shape = 'u32[144,128]{1,0:T(1,128)}', space=vmem, size = 0x12000, scoped, tag = 'internal scratch']
  %s0 = inlined_call_operand.vmem [shape: f32[112,24], index: 0, kind: input, shape index: {}]
  %s1 = inlined_call_operand.vmem [shape: f32[112,32], index: 1, kind: input, shape index: {}]
  %s2 = inlined_call_operand.vmem [shape: f32[112,1], index: 2, kind: input, shape index: {}]
  %s3 = inlined_call_operand.hbm [shape: f32[112,128], index: 3, kind: input, shape index: {}]
  %s4 = inlined_call_operand.vmem [shape: f32[368,128], index: 4, kind: input, shape index: {}]
  %s5 = inlined_call_operand.vmem [shape: f32[112,48], index: 5, kind: output, shape index: {}]
  %s6 = sld [smem:[#allocation0]]
  $region57: #{tpu_custom_call.1} parent=0
    _
  %s8 = ssub.s32 1, %s6
  %s9 = scalar_select 0, %s8, %s6
  $region1: #{tpu_custom_call.1} parent=0
    #allocation2 [shape = 'u8[57344]{0}', space=vmem, size = 0xe000, scoped, tag = 'input window, operand 3']
    #allocation3 [shape = 's32[2]{0}', space=sflag, size = 0x8, scoped, tag = 'scoped memory for tpu_custom_call.1']
    %10 = vsyncpa [#allocation3], 0
    %s11 = scalar_lea.sflag [#allocation3], 1
    %12 = vsyncpa %s11, 0
    loop: start=0, step=1, limit=4
    $region2: #{tpu_custom_call.1} parent=1 // loop_pre_header
      _
    $region3: #{tpu_custom_call.1} parent=1 // loop_header
      %s14 = sphi 0, %s18
      %p15 = scmp.ge.s32.totalorder %s14, 4
      %s24 = sphi 0, %s26
      %s27 = sphi 0, %s24
      %s28 = sphi 0, %s27
      %s44 = sphi 0, %s28
      %s50 = sphi 0, %s52
      %s53 = sphi 0, %s50
      %s54 = sphi 0, %s53
      %s70 = sphi 0, %s54
      %s76 = sphi 0, %s78
      %s79 = sphi 0, %s76
      %s80 = sphi 0, %s79
      %s96 = sphi 0, %s80
      %s102 = sphi 0, %s104
      %s105 = sphi 0, %s102
      %s106 = sphi 0, %s105
      %s122 = sphi 0, %s106
      %s126 = sphi 0, %s126
      %s128 = sphi 0, %s126
      %s129 = sphi 0, %s128
      %s143 = sphi 0, %s129
      %s149 = sphi 0, %s151
      %s152 = sphi 0, %s149
      %s153 = sphi 0, %s152
      %s169 = sphi 0, %s153
    $region4: #{tpu_custom_call.1} parent=1 // loop_header_branch
      %17 = sbr.rel (%p15) target = $region8
    $region5: #{tpu_custom_call.1} parent=1 // loop_body
      %s19 = ssub.s32 %s14, 1
      %s20 = ssub.s32 %s14, 2
      %s21 = sadd.s32 %s14, 1
      %s22 = ssub.s32 %s14, %s21
      %p23 = scmp.eq.s32.totalorder %s22, 0
      %s25 = sadd.s32 %s24, 1
      %s26 = scalar_select %p23, %s24, %s25
      %p29 = pneg %p23
      %p30 = scmp.eq.s32.totalorder %s14, 1
      %p31 = por %p29, %p30
      %p32 = scmp.ne.s32.totalorder %s24, %s27
      %p33 = scmp.eq.s32.totalorder %s14, 0
      %p34 = por %p32, %p33
      %p35 = scmp.ne.s32.totalorder %s24, %s27
      %p36 = scmp.eq.s32.totalorder %s19, 1
      %p37 = por %p35, %p36
      %p38 = scmp.ne.s32.totalorder %s27, %s28
      %p39 = scmp.eq.s32.totalorder %s19, 0
      %p40 = por %p38, %p39
      %p41 = scmp.ne.s32.totalorder %s27, %s28
      %p42 = scmp.eq.s32.totalorder %s20, 1
      %p43 = por %p41, %p42
      %p45 = scmp.ne.s32.totalorder %s28, %s44
      %p46 = scmp.eq.s32.totalorder %s20, 0
      %p47 = por %p45, %p46
      %s48 = ssub.s32 %s14, %s21
      %p49 = scmp.eq.s32.totalorder %s48, 0
      %s51 = sadd.s32 %s50, 1
      %s52 = scalar_select %p49, %s50, %s51
      %p55 = pneg %p49
      %p56 = scmp.eq.s32.totalorder %s14, 1
      %p57 = por %p55, %p56
      %p58 = scmp.ne.s32.totalorder %s50, %s53
      %p59 = scmp.eq.s32.totalorder %s14, 0
      %p60 = por %p58, %p59
      %p61 = scmp.ne.s32.totalorder %s50, %s53
      %p62 = scmp.eq.s32.totalorder %s19, 1
      %p63 = por %p61, %p62
      %p64 = scmp.ne.s32.totalorder %s53, %s54
      %p65 = scmp.eq.s32.totalorder %s19, 0
      %p66 = por %p64, %p65
      %p67 = scmp.ne.s32.totalorder %s53, %s54
      %p68 = scmp.eq.s32.totalorder %s20, 1
      %p69 = por %p67, %p68
      %p71 = scmp.ne.s32.totalorder %s54, %s70
      %p72 = scmp.eq.s32.totalorder %s20, 0
      %p73 = por %p71, %p72
      %s74 = ssub.s32 %s14, %s21
      %p75 = scmp.eq.s32.totalorder %s74, 0
      %s77 = sadd.s32 %s76, 1
      %s78 = scalar_select %p75, %s76, %s77
      %p81 = pneg %p75
      %p82 = scmp.eq.s32.totalorder %s14, 1
      %p83 = por %p81, %p82
      %p84 = scmp.ne.s32.totalorder %s76, %s79
      %p85 = scmp.eq.s32.totalorder %s14, 0
      %p86 = por %p84, %p85
      %p87 = scmp.ne.s32.totalorder %s76, %s79
      %p88 = scmp.eq.s32.totalorder %s19, 1
      %p89 = por %p87, %p88
      %p90 = scmp.ne.s32.totalorder %s79, %s80
      %p91 = scmp.eq.s32.totalorder %s19, 0
      %p92 = por %p90, %p91
      %p93 = scmp.ne.s32.totalorder %s79, %s80
      %p94 = scmp.eq.s32.totalorder %s20, 1
      %p95 = por %p93, %p94
      %p97 = scmp.ne.s32.totalorder %s80, %s96
      %p98 = scmp.eq.s32.totalorder %s20, 0
      %p99 = por %p97, %p98
      %s100 = ssub.s32 %s14, %s21
      %p101 = scmp.eq.s32.totalorder %s100, 0
      %s103 = sadd.s32 %s102, 1
      %s104 = scalar_select %p101, %s102, %s103
      %p107 = pneg %p101
      %p108 = scmp.eq.s32.totalorder %s14, 1
      %p109 = por %p107, %p108
      %p110 = scmp.ne.s32.totalorder %s102, %s105
      %p111 = scmp.eq.s32.totalorder %s14, 0
      %p112 = por %p110, %p111
      %p113 = scmp.ne.s32.totalorder %s102, %s105
      %p114 = scmp.eq.s32.totalorder %s19, 1
      %p115 = por %p113, %p114
      %p116 = scmp.ne.s32.totalorder %s105, %s106
      %p117 = scmp.eq.s32.totalorder %s19, 0
      %p118 = por %p116, %p117
      %p119 = scmp.ne.s32.totalorder %s105, %s106
      %p120 = scmp.eq.s32.totalorder %s20, 1
      %p121 = por %p119, %p120
      %p123 = scmp.ne.s32.totalorder %s106, %s122
      %p124 = scmp.eq.s32.totalorder %s20, 0
      %p125 = por %p123, %p124
      %s127 = sadd.s32 %s126, 1
      %p130 = scmp.eq.s32.totalorder %s14, 1
      %p131 = scmp.ne.s32.totalorder %s126, %s128
      %p132 = scmp.eq.s32.totalorder %s14, 0
      %p133 = por %p131, %p132
      %p134 = scmp.ne.s32.totalorder %s126, %s128
      %p135 = scmp.eq.s32.totalorder %s19, 1
      %p136 = por %p134, %p135
      %p137 = scmp.ne.s32.totalorder %s128, %s129
      %p138 = scmp.eq.s32.totalorder %s19, 0
      %p139 = por %p137, %p138
      %p140 = scmp.ne.s32.totalorder %s128, %s129
      %p141 = scmp.eq.s32.totalorder %s20, 1
      %p142 = por %p140, %p141
      %p144 = scmp.ne.s32.totalorder %s129, %s143
      %p145 = scmp.eq.s32.totalorder %s20, 0
      %p146 = por %p144, %p145
      %s147 = ssub.s32 %s14, %s21
      %p148 = scmp.eq.s32.totalorder %s147, 0
      %s150 = sadd.s32 %s149, 1
      %s151 = scalar_select %p148, %s149, %s150
      %p154 = pneg %p148
      %p155 = scmp.eq.s32.totalorder %s14, 1
      %p156 = por %p154, %p155
      %p157 = scmp.ne.s32.totalorder %s149, %s152
      %p158 = scmp.eq.s32.totalorder %s14, 0
      %p159 = por %p157, %p158
      %p160 = scmp.ne.s32.totalorder %s149, %s152
      %p161 = scmp.eq.s32.totalorder %s19, 1
      %p162 = por %p160, %p161
      %p163 = scmp.ne.s32.totalorder %s152, %s153
      %p164 = scmp.eq.s32.totalorder %s19, 0
      %p165 = por %p163, %p164
      %p166 = scmp.ne.s32.totalorder %s152, %s153
      %p167 = scmp.eq.s32.totalorder %s20, 1
      %p168 = por %p166, %p167
      %p170 = scmp.ne.s32.totalorder %s153, %s169
      %p171 = scmp.eq.s32.totalorder %s20, 0
      %p172 = por %p170, %p171
      %p173 = scmp.le.s32.totalorder 1, %s14
      %p174 = scmp.lt.s32.totalorder %s14, 3
      %p175 = pnand %p173, %p174
      %p176 = pneg %p175
      // Predicated region
      $region9: #{tpu_custom_call.1} parent=5 // pred_check
        _
      $region10: #{tpu_custom_call.1} parent=5 // pred_check_branch
        %178 = sbr.rel (%p175) target = $region12
      $region11: #{tpu_custom_call.1} parent=5 // pred_region
        %s179 = ssub.s32 %s14, 1
        // Predicated region
        $region13: #{tpu_custom_call.1} parent=11 // pred_check
          %p180 = pneg %p139
        $region14: #{tpu_custom_call.1} parent=11 // pred_check_branch
          %182 = sbr.rel (%p180) target = $region16
        $region15: #{tpu_custom_call.1} parent=11 // pred_region
          _
        $region16: #{tpu_custom_call.1} parent=11 // pred_fallthru
          _
      $region12: #{tpu_custom_call.1} parent=5 // pred_fallthru
        _
      %p183 = scmp.lt.s32.totalorder %s14, 2
      // Predicated region
      $region17: #{tpu_custom_call.1} parent=5 // pred_check
        %p184 = pneg %p183
      $region18: #{tpu_custom_call.1} parent=5 // pred_check_branch
        %186 = sbr.rel (%p184) target = $region20
      $region19: #{tpu_custom_call.1} parent=5 // pred_region
        // Predicated region
        $region21: #{tpu_custom_call.1} parent=19 // pred_check
          %p187 = pneg %p34
        $region22: #{tpu_custom_call.1} parent=19 // pred_check_branch
          %189 = sbr.rel (%p187) target = $region24
        $region23: #{tpu_custom_call.1} parent=19 // pred_region
          %s190 = smul.u32 7, %s14
          %p191 = scmp.lt.s32.totalorder %s190, 13
          %s192 = scalar_select %p191, %s190, 13
          %s193 = smul.addr %s192, 8
          %s194 = scalar_lea.vmem %s0, %s193
          %s195 = smul.u32 7, %s14
        $region24: #{tpu_custom_call.1} parent=19 // pred_fallthru
          _
        // Predicated region
        $region25: #{tpu_custom_call.1} parent=19 // pred_check
          %p196 = pneg %p60
        $region26: #{tpu_custom_call.1} parent=19 // pred_check_branch
          %198 = sbr.rel (%p196) target = $region28
        $region27: #{tpu_custom_call.1} parent=19 // pred_region
          %s199 = smul.u32 7, %s14
          %p200 = scmp.lt.s32.totalorder %s199, 13
          %s201 = scalar_select %p200, %s199, 13
          %s202 = smul.addr %s201, 8
          %s203 = scalar_lea.vmem %s1, %s202
          %s204 = smul.u32 7, %s14
        $region28: #{tpu_custom_call.1} parent=19 // pred_fallthru
          _
        // Predicated region
        $region29: #{tpu_custom_call.1} parent=19 // pred_check
          %p205 = pneg %p86
        $region30: #{tpu_custom_call.1} parent=19 // pred_check_branch
          %207 = sbr.rel (%p205) target = $region32
        $region31: #{tpu_custom_call.1} parent=19 // pred_region
          %s208 = smul.u32 7, %s14
          %p209 = scmp.lt.s32.totalorder %s208, 13
          %s210 = scalar_select %p209, %s208, 13
          %s211 = smul.addr %s210, 8
          %s212 = scalar_lea.vmem %s2, %s211
          %s213 = smul.u32 7, %s14
        $region32: #{tpu_custom_call.1} parent=19 // pred_fallthru
          _
        // Predicated region
        $region33: #{tpu_custom_call.1} parent=19 // pred_check
          %p214 = pneg %p112
        $region34: #{tpu_custom_call.1} parent=19 // pred_check_branch
          %216 = sbr.rel (%p214) target = $region36
        $region35: #{tpu_custom_call.1} parent=19 // pred_region
          %s217 = sand.u32 %s102, 1
          %s218 = scalar_lea.sflag [#allocation3], %s217
          %s219 = sand.u32 %s102, 1
          %s220 = smul.addr %s219, 56
          %s221 = scalar_lea.vmem [#allocation2], %s220
          %s222 = smul.u32 7, %s14
          %s224 = ssub.s32 896, 896
          %225 = vsyncadd %s218, %s224
          %s226 = smul.addr %s222, 128
          %s227 = scalar_lea.hbm %s3, %s226
          %s228 = sshll.u32 %s221, 4
          %s229 = int_to_ptr.vmem [resolvable:$true] %s228
          %234 = dma.hbm_to_vmem [thread:$0]  %s227, 896, %s229, %s218, 128, 128, 8
        $region36: #{tpu_custom_call.1} parent=19 // pred_fallthru
          _
      $region20: #{tpu_custom_call.1} parent=5 // pred_fallthru
        _
      %p235 = scmp.le.s32.totalorder 1, %s14
      %p236 = scmp.lt.s32.totalorder %s14, 3
      %p237 = pnand %p235, %p236
      %p238 = pneg %p237
      // Predicated region
      $region37: #{tpu_custom_call.1} parent=5 // pred_check
        _
      $region38: #{tpu_custom_call.1} parent=5 // pred_check_branch
        %240 = sbr.rel (%p237) target = $region40
      $region39: #{tpu_custom_call.1} parent=5 // pred_region
        %s241 = ssub.s32 %s14, 1
        %s242 = sand.u32 %s105, 1
        %s243 = scalar_lea.sflag [#allocation3], %s242
        %s244 = sand.u32 %s105, 1
        %s245 = smul.addr %s244, 56
        %s246 = scalar_lea.vmem [#allocation2], %s245
        // Predicated region
        $region41: #{tpu_custom_call.1} parent=39 // pred_check
          %p247 = pneg %p118
        $region42: #{tpu_custom_call.1} parent=39 // pred_check_branch
          %249 = sbr.rel (%p247) target = $region44
        $region43: #{tpu_custom_call.1} parent=39 // pred_region
          %250 = dma.done %s243, 896
        $region44: #{tpu_custom_call.1} parent=39 // pred_fallthru
          _
        %s251 = smul.u32 7, %s19
        %p252 = scmp.lt.s32.totalorder %s251, 13
        %s253 = scalar_select %p252, %s251, 13
        %s254 = smul.addr %s253, 8
        %s255 = scalar_lea.vmem %s0, %s254
        %p256 = pneg %p40
        %p257 = pneg %p37
        %s258 = smul.u32 7, %s19
        %p259 = scmp.lt.s32.totalorder %s258, 13
        %s260 = scalar_select %p259, %s258, 13
        %s261 = smul.addr %s260, 8
        %s262 = scalar_lea.vmem %s1, %s261
        %p263 = pneg %p66
        %p264 = pneg %p63
        %s265 = smul.u32 7, %s19
        %p266 = scmp.lt.s32.totalorder %s265, 13
        %s267 = scalar_select %p266, %s265, 13
        %s268 = smul.addr %s267, 8
        %s269 = scalar_lea.vmem %s2, %s268
        %p270 = pneg %p92
        %p271 = pneg %p89
        %s272 = sand.u32 %s105, 1
        %s273 = scalar_lea.sflag [#allocation3], %s272
        %s274 = sand.u32 %s105, 1
        %s275 = smul.addr %s274, 56
        %s276 = scalar_lea.vmem [#allocation2], %s275
        %p277 = pneg %p118
        %p278 = pneg %p115
        %p279 = pneg %p139
        %p280 = pneg %p136
        %p281 = pneg %p165
        %p282 = pneg %p162
        %s283 = smul.u32 7, %s19
        %p284 = scmp.lt.s32.totalorder %s283, 13
        %s285 = scalar_select %p284, %s283, 13
        %s286 = smul.addr %s285, 8
        %s287 = scalar_lea.vmem %s5, %s286
        %s288 = smul.u32 7, %s19
        %p289 = scmp.lt.s32.totalorder %s288, 13
        %s290 = scalar_select %p289, %s288, 13
        %s291 = smul.addr %s290, 8
        %s292 = scalar_lea.vmem %s0, %s291
        %s293 = smul.u32 7, %s19
        %s294 = smul.u32 7, %s19
        %p295 = scmp.lt.s32.totalorder %s294, 13
        %s296 = scalar_select %p295, %s294, 13
        %s297 = smul.addr %s296, 8
        %s298 = scalar_lea.vmem %s1, %s297
        %s299 = smul.u32 7, %s19
        %s300 = smul.u32 7, %s19
        %p301 = scmp.lt.s32.totalorder %s300, 13
        %s302 = scalar_select %p301, %s300, 13
        %s303 = smul.addr %s302, 8
        %s304 = scalar_lea.vmem %s2, %s303
        %s305 = smul.u32 7, %s19
        %s306 = smul.u32 7, %s19
        %s307 = smul.u32 7, %s19
        %p308 = scmp.lt.s32.totalorder %s307, 13
        %s309 = scalar_select %p308, %s307, 13
        %s310 = smul.addr %s309, 8
        %s311 = scalar_lea.vmem %s5, %s310
        %s312 = smul.u32 7, %s19
        %v313 = vld [vmem:[%s292] sm:$0xff]
        %v314 = vld [vmem:[%s292 + $0x8] sm:$0xff]
        %v315 = vld [vmem:[%s292 + $0x10] sm:$0xff]
        %v316 = vld [vmem:[%s292 + $0x18] sm:$0xff]
        %v317 = vld [vmem:[%s292 + $0x20] sm:$0xff]
        %v318 = vld [vmem:[%s292 + $0x28] sm:$0xff]
        %v319 = vld [vmem:[%s292 + $0x30] sm:$0xff]
        %v320 = vld [vmem:[%s298] sm:$0xff]
        %v321 = vld [vmem:[%s298 + $0x8] sm:$0xff]
        %v322 = vld [vmem:[%s298 + $0x10] sm:$0xff]
        %v323 = vld [vmem:[%s298 + $0x18] sm:$0xff]
        %v324 = vld [vmem:[%s298 + $0x20] sm:$0xff]
        %v325 = vld [vmem:[%s298 + $0x28] sm:$0xff]
        %v326 = vld [vmem:[%s298 + $0x30] sm:$0xff]
        %v327 = vld [vmem:[%s304] sm:$0xff]
        %v328 = vld [vmem:[%s304 + $0x8] sm:$0xff]
        %v329 = vld [vmem:[%s304 + $0x10] sm:$0xff]
        %v330 = vld [vmem:[%s304 + $0x18] sm:$0xff]
        %v331 = vld [vmem:[%s304 + $0x20] sm:$0xff]
        %v332 = vld [vmem:[%s304 + $0x28] sm:$0xff]
        %v333 = vld [vmem:[%s304 + $0x30] sm:$0xff]
        %v334 = vld [vmem:[%s246] sm:$0xff]
        %v335 = vld [vmem:[%s246 + $0x8] sm:$0xff]
        %v336 = vld [vmem:[%s246 + $0x10] sm:$0xff]
        %v337 = vld [vmem:[%s246 + $0x18] sm:$0xff]
        %v338 = vld [vmem:[%s246 + $0x20] sm:$0xff]
        %v339 = vld [vmem:[%s246 + $0x28] sm:$0xff]
        %v340 = vld [vmem:[%s246 + $0x30] sm:$0xff]
        %v341 = vld [vmem:[%s4] sm:$0x1]
        %v342 = vld [vmem:[%s4 + $0x1] sm:$0x1]
        %vm343 = vcmask 195584
        %v344 = vsel %vm343, %v313, 0.0
        %345 = vadd.xlane.f32.xlu0 %v344
        %v346 = vpop.xlane.xlu0 %345
        %v347 = vsel %vm343, %v314, 0.0
        %348 = vadd.xlane.f32.xlu0 %v347
        %v349 = vpop.xlane.xlu0 %348
        %v350 = vsel %vm343, %v315, 0.0
        %351 = vadd.xlane.f32.xlu0 %v350
        %v352 = vpop.xlane.xlu0 %351
        %v353 = vsel %vm343, %v316, 0.0
        %354 = vadd.xlane.f32.xlu0 %v353
        %v355 = vpop.xlane.xlu0 %354
        %v356 = vsel %vm343, %v317, 0.0
        %357 = vadd.xlane.f32.xlu0 %v356
        %v358 = vpop.xlane.xlu0 %357
        %v359 = vsel %vm343, %v318, 0.0
        %360 = vadd.xlane.f32.xlu0 %v359
        %v361 = vpop.xlane.xlu0 %360
        %v362 = vsel %vm343, %v319, 0.0
        %363 = vadd.xlane.f32.xlu0 %v362
        %v364 = vpop.xlane.xlu0 %363
        %v365 = vrcp.pop 24.0
        %v366 = vmul.f32 %v346, %v365
        %v367 = vmul.f32 %v349, %v365
        %v368 = vmul.f32 %v352, %v365
        %v369 = vmul.f32 %v355, %v365
        %v370 = vmul.f32 %v358, %v365
        %v371 = vmul.f32 %v361, %v365
        %v372 = vmul.f32 %v364, %v365
        %v373 = vmul.f32 %v313, %v313
        %v374 = vmul.f32 %v314, %v314
        %v375 = vmul.f32 %v315, %v315
        %v376 = vmul.f32 %v316, %v316
        %v377 = vmul.f32 %v317, %v317
        %v378 = vmul.f32 %v318, %v318
        %v379 = vmul.f32 %v319, %v319
        %v380 = vsel %vm343, %v373, 0.0
        %381 = vadd.xlane.f32.xlu0 %v380
        %v382 = vpop.xlane.xlu0 %381
        %v383 = vsel %vm343, %v374, 0.0
        %384 = vadd.xlane.f32.xlu0 %v383
        %v385 = vpop.xlane.xlu0 %384
        %v386 = vsel %vm343, %v375, 0.0
        %387 = vadd.xlane.f32.xlu0 %v386
        %v388 = vpop.xlane.xlu0 %387
        %v389 = vsel %vm343, %v376, 0.0
        %390 = vadd.xlane.f32.xlu0 %v389
        %v391 = vpop.xlane.xlu0 %390
        %v392 = vsel %vm343, %v377, 0.0
        %393 = vadd.xlane.f32.xlu0 %v392
        %v394 = vpop.xlane.xlu0 %393
        %v395 = vsel %vm343, %v378, 0.0
        %396 = vadd.xlane.f32.xlu0 %v395
        %v397 = vpop.xlane.xlu0 %396
        %v398 = vsel %vm343, %v379, 0.0
        %399 = vadd.xlane.f32.xlu0 %v398
        %v400 = vpop.xlane.xlu0 %399
        %v401 = vmul.f32 %v382, %v365
        %v402 = vmul.f32 %v385, %v365
        %v403 = vmul.f32 %v388, %v365
        %v404 = vmul.f32 %v391, %v365
        %v405 = vmul.f32 %v394, %v365
        %v406 = vmul.f32 %v397, %v365
        %v407 = vmul.f32 %v400, %v365
        %v408 = vmul.f32 %v366, %v366
        %v409 = vmul.f32 %v367, %v367
        %v410 = vmul.f32 %v368, %v368
        %v411 = vmul.f32 %v369, %v369
        %v412 = vmul.f32 %v370, %v370
        %v413 = vmul.f32 %v371, %v371
        %v414 = vmul.f32 %v372, %v372
        %v415 = vsub.f32 %v401, %v408
        %v416 = vsub.f32 %v402, %v409
        %v417 = vsub.f32 %v403, %v410
        %v418 = vsub.f32 %v404, %v411
        %v419 = vsub.f32 %v405, %v412
        %v420 = vsub.f32 %v406, %v413
        %v421 = vsub.f32 %v407, %v414
        %v422 = vmax.f32 %v415, 0.0
        %v423 = vmax.f32 %v416, 0.0
        %v424 = vmax.f32 %v417, 0.0
        %v425 = vmax.f32 %v418, 0.0
        %v426 = vmax.f32 %v419, 0.0
        %v427 = vmax.f32 %v420, 0.0
        %v428 = vmax.f32 %v421, 0.0
        %v429 = vsub.f32 %v313, %v366
        %v430 = vsub.f32 %v314, %v367
        %v431 = vsub.f32 %v315, %v368
        %v432 = vsub.f32 %v316, %v369
        %v433 = vsub.f32 %v317, %v370
        %v434 = vsub.f32 %v318, %v371
        %v435 = vsub.f32 %v319, %v372
        %v436 = vadd.f32 %v422, 1e-05
        %v437 = vadd.f32 %v423, 1e-05
        %v438 = vadd.f32 %v424, 1e-05
        %v439 = vadd.f32 %v425, 1e-05
        %v440 = vadd.f32 %v426, 1e-05
        %v441 = vadd.f32 %v427, 1e-05
        %v442 = vadd.f32 %v428, 1e-05
        %v443 = vrsqrt.pop %v436
        %v444 = vrsqrt.pop %v437
        %v445 = vrsqrt.pop %v438
        %v446 = vrsqrt.pop %v439
        %v447 = vrsqrt.pop %v440
        %v448 = vrsqrt.pop %v441
        %v449 = vrsqrt.pop %v442
        %v450 = vmul.f32 %v429, %v443
        %v451 = vmul.f32 %v430, %v444
        %v452 = vmul.f32 %v431, %v445
        %v453 = vmul.f32 %v432, %v446
        %v454 = vmul.f32 %v433, %v447
        %v455 = vmul.f32 %v434, %v448
        %v456 = vmul.f32 %v435, %v449
        %v457 = vlaneseq
        %v458 = vshrl.u32 %v457, 7
        %v459 = vsub.s32 0, %v458
        %v460 = vrot.slane %v341, %v459
        %v461 = vmul.f32 %v450, %v460
        %v462 = vmul.f32 %v451, %v460
        %v463 = vmul.f32 %v452, %v460
        %v464 = vmul.f32 %v453, %v460
        %v465 = vmul.f32 %v454, %v460
        %v466 = vmul.f32 %v455, %v460
        %v467 = vmul.f32 %v456, %v460
        %v468 = vlaneseq
        %v469 = vshrl.u32 %v468, 7
        %v470 = vsub.s32 0, %v469
        %v471 = vrot.slane %v342, %v470
        %v472 = vadd.f32 %v461, %v471
        %v473 = vadd.f32 %v462, %v471
        %v474 = vadd.f32 %v463, %v471
        %v475 = vadd.f32 %v464, %v471
        %v476 = vadd.f32 %v465, %v471
        %v477 = vadd.f32 %v466, %v471
        %v478 = vadd.f32 %v467, %v471
        %v479 = vld [vmem:[%s4 + $0x18] sm:$0xff]
        %v480 = vld [vmem:[%s4 + $0x20] sm:$0xff]
        %v481 = vld [vmem:[%s4 + $0x28] sm:$0xff]
        %v482 = vld [vmem:[%s4 + $0x2] sm:$0x1]
        %v483 = vlaneseq
        %v484 = vshrl.u32 %v483, 7
        %v485 = vsub.s32 0, %v484
        %v486 = vrot.slane %v482, %v485
        %v488 = vsel %vm343, %v472, 0
        %v491 = vsel %vm343, %v473, 0
        %v494 = vsel %vm343, %v474, 0
        %v497 = vsel %vm343, %v475, 0
        %v500 = vsel %vm343, %v476, 0
        %v503 = vsel %vm343, %v477, 0
        %v506 = vsel %vm343, %v478, 0
        %508 = vmatprep.subr.mxu0 0.0
        %509 = vmatpush1.msra.mxu0 0.0
        %510 = vmatprep.subr.mxu0 0.0
        %511 = vmatpush1.msra.mxu0 0.0
        %512 = vmatprep.subr.mxu0 0.0
        %513 = vmatpush1.msra.mxu0 0.0
        %514 = vmatprep.subr.mxu0 0.0
        %515 = vmatpush1.msra.mxu0 0.0
        %516 = vmatprep.subr.mxu0 0.0
        %517 = vmatpush1.msra.mxu0 0.0
        %518 = vmatprep.subr.mxu0 0.0
        %519 = vmatpush1.msra.mxu0 0.0
        %520 = vmatprep.subr.mxu0 0.0
        %521 = vmatpush1.msra.mxu0 0.0
        %522 = vmatprep.subr.mxu0 0.0
        %523 = vmatpush1.msra.mxu0 0.0
        %524 = vmatprep.subr.mxu0 0.0
        %525 = vmatpush1.msra.mxu0 0.0
        %526 = vmatprep.subr.mxu0 0.0
        %527 = vmatpush1.msra.mxu0 0.0
        %528 = vmatprep.subr.mxu0 0.0
        %529 = vmatpush1.msra.mxu0 0.0
        %530 = vmatprep.subr.mxu0 0.0
        %531 = vmatpush1.msra.mxu0 0.0
        %532 = vmatprep.subr.mxu0 0.0
        %533 = vmatpush1.msra.mxu0 0.0
        %534 = vmatprep.subr.mxu0 0.0
        %535 = vmatpush1.msra.mxu0 %v481
        %536 = vmatprep.subr.mxu0 0.0
        %537 = vmatpush1.msra.mxu0 %v480
        %538 = vmatprep.subr.mxu0 0.0
        %539 = vmatpush1.msra.mxu0 %v479
        %540 = vmatprep.subr.mxu0 0.0
        %541 = vmatpush2.msra.mxu0 0.0
        %542 = vmatprep.subr.mxu0 0.0
        %543 = vmatpush2.msra.mxu0 0.0
        %544 = vmatprep.subr.mxu0 0.0
        %545 = vmatpush2.msra.mxu0 0.0
        %546 = vmatprep.subr.mxu0 0.0
        %547 = vmatpush2.msra.mxu0 0.0
        %548 = vmatprep.subr.mxu0 0.0
        %549 = vmatpush2.msra.mxu0 0.0
        %550 = vmatprep.subr.mxu0 0.0
        %551 = vmatpush2.msra.mxu0 0.0
        %552 = vmatprep.subr.mxu0 0.0
        %553 = vmatpush2.msra.mxu0 0.0
        %554 = vmatprep.subr.mxu0 0.0
        %555 = vmatpush2.msra.mxu0 0.0
        %556 = vmatprep.subr.mxu0 0.0
        %557 = vmatpush2.msra.mxu0 0.0
        %558 = vmatprep.subr.mxu0 0.0
        %559 = vmatpush2.msra.mxu0 0.0
        %560 = vmatprep.subr.mxu0 0.0
        %561 = vmatpush2.msra.mxu0 0.0
        %562 = vmatprep.subr.mxu0 0.0
        %563 = vmatpush2.msra.mxu0 0.0
        %564 = vmatprep.subr.mxu0 0.0
        %565 = vmatpush2.msra.mxu0 0.0
        %566 = vmatprep.subr.mxu0 0.0
        %567 = vmatpush2.msra.mxu0 0.0
        %568 = vmatprep.subr.mxu0 0.0
        %569 = vmatpush2.msra.mxu0 0.0
        %570 = vmatprep.subr.mxu0 0.0
        %571 = vmatpush2.msra.mxu0 0.0
        %572 = vmatprep.mubr.f32.mxu0 0.0
        %573 = vmatmul.mubr.f32.gmra.mxu0 %v488
        %v574 = vpop.f32.mrf.mxu0
        %v575 = vadd.f32 %v486, %v574
        %v576 = vpop.f32.mrf.mxu0
        %577 = vmatprep.mubr.f32.mxu0 0.0
        %578 = vmatmul.mubr.f32.gmra.mxu0 %v491
        %v579 = vpop.f32.mrf.mxu0
        %v580 = vadd.f32 %v486, %v579
        %v581 = vpop.f32.mrf.mxu0
        %582 = vmatprep.mubr.f32.mxu0 0.0
        %583 = vmatmul.mubr.f32.gmra.mxu0 %v494
        %v584 = vpop.f32.mrf.mxu0
        %v585 = vadd.f32 %v486, %v584
        %v586 = vpop.f32.mrf.mxu0
        %587 = vmatprep.mubr.f32.mxu0 0.0
        %588 = vmatmul.mubr.f32.gmra.mxu0 %v497
        %v589 = vpop.f32.mrf.mxu0
        %v590 = vadd.f32 %v486, %v589
        %v591 = vpop.f32.mrf.mxu0
        %592 = vmatprep.mubr.f32.mxu0 0.0
        %593 = vmatmul.mubr.f32.gmra.mxu0 %v500
        %v594 = vpop.f32.mrf.mxu0
        %v595 = vadd.f32 %v486, %v594
        %v596 = vpop.f32.mrf.mxu0
        %597 = vmatprep.mubr.f32.mxu0 0.0
        %598 = vmatmul.mubr.f32.gmra.mxu0 %v503
        %v599 = vpop.f32.mrf.mxu0
        %v600 = vadd.f32 %v486, %v599
        %v601 = vpop.f32.mrf.mxu0
        %602 = vmatprep.mubr.f32.mxu0 0.0
        %603 = vmatmul.mubr.f32.gmra.mxu0 %v506
        %v604 = vpop.f32.mrf.mxu0
        %v605 = vadd.f32 %v486, %v604
        %v606 = vpop.f32.mrf.mxu0
        %607 = vdwg.mxu0
        %v608 = vmax.f32 %v575, 0.0
        %v609 = vmax.f32 %v580, 0.0
        %v610 = vmax.f32 %v585, 0.0
        %v611 = vmax.f32 %v590, 0.0
        %v612 = vmax.f32 %v595, 0.0
        %v613 = vmax.f32 %v600, 0.0
        %v614 = vmax.f32 %v605, 0.0
        %v615 = vld [vmem:[%s4 + $0x3] sm:$0x1]
        %v616 = vld [vmem:[%s4 + $0x4] sm:$0x1]
        %vm617 = vcmask 261120
        %v618 = vsel %vm617, %v608, 0.0
        %619 = vadd.xlane.f32.xlu0 %v618
        %v620 = vpop.xlane.xlu0 %619
        %v621 = vsel %vm617, %v609, 0.0
        %622 = vadd.xlane.f32.xlu0 %v621
        %v623 = vpop.xlane.xlu0 %622
        %v624 = vsel %vm617, %v610, 0.0
        %625 = vadd.xlane.f32.xlu0 %v624
        %v626 = vpop.xlane.xlu0 %625
        %v627 = vsel %vm617, %v611, 0.0
        %628 = vadd.xlane.f32.xlu0 %v627
        %v629 = vpop.xlane.xlu0 %628
        %v630 = vsel %vm617, %v612, 0.0
        %631 = vadd.xlane.f32.xlu0 %v630
        %v632 = vpop.xlane.xlu0 %631
        %v633 = vsel %vm617, %v613, 0.0
        %634 = vadd.xlane.f32.xlu0 %v633
        %v635 = vpop.xlane.xlu0 %634
        %v636 = vsel %vm617, %v614, 0.0
        %637 = vadd.xlane.f32.xlu0 %v636
        %v638 = vpop.xlane.xlu0 %637
        %v639 = vrcp.pop 32.0
        %v640 = vmul.f32 %v620, %v639
        %v641 = vmul.f32 %v623, %v639
        %v642 = vmul.f32 %v626, %v639
        %v643 = vmul.f32 %v629, %v639
        %v644 = vmul.f32 %v632, %v639
        %v645 = vmul.f32 %v635, %v639
        %v646 = vmul.f32 %v638, %v639
        %v647 = vmul.f32 %v608, %v608
        %v648 = vmul.f32 %v609, %v609
        %v649 = vmul.f32 %v610, %v610
        %v650 = vmul.f32 %v611, %v611
        %v651 = vmul.f32 %v612, %v612
        %v652 = vmul.f32 %v613, %v613
        %v653 = vmul.f32 %v614, %v614
        %v654 = vsel %vm617, %v647, 0.0
        %655 = vadd.xlane.f32.xlu0 %v654
        %v656 = vpop.xlane.xlu0 %655
        %v657 = vsel %vm617, %v648, 0.0
        %658 = vadd.xlane.f32.xlu0 %v657
        %v659 = vpop.xlane.xlu0 %658
        %v660 = vsel %vm617, %v649, 0.0
        %661 = vadd.xlane.f32.xlu0 %v660
        %v662 = vpop.xlane.xlu0 %661
        %v663 = vsel %vm617, %v650, 0.0
        %664 = vadd.xlane.f32.xlu0 %v663
        %v665 = vpop.xlane.xlu0 %664
        %v666 = vsel %vm617, %v651, 0.0
        %667 = vadd.xlane.f32.xlu0 %v666
        %v668 = vpop.xlane.xlu0 %667
        %v669 = vsel %vm617, %v652, 0.0
        %670 = vadd.xlane.f32.xlu0 %v669
        %v671 = vpop.xlane.xlu0 %670
        %v672 = vsel %vm617, %v653, 0.0
        %673 = vadd.xlane.f32.xlu0 %v672
        %v674 = vpop.xlane.xlu0 %673
        %v675 = vmul.f32 %v656, %v639
        %v676 = vmul.f32 %v659, %v639
        %v677 = vmul.f32 %v662, %v639
        %v678 = vmul.f32 %v665, %v639
        %v679 = vmul.f32 %v668, %v639
        %v680 = vmul.f32 %v671, %v639
        %v681 = vmul.f32 %v674, %v639
        %v682 = vmul.f32 %v640, %v640
        %v683 = vmul.f32 %v641, %v641
        %v684 = vmul.f32 %v642, %v642
        %v685 = vmul.f32 %v643, %v643
        %v686 = vmul.f32 %v644, %v644
        %v687 = vmul.f32 %v645, %v645
        %v688 = vmul.f32 %v646, %v646
        %v689 = vsub.f32 %v675, %v682
        %v690 = vsub.f32 %v676, %v683
        %v691 = vsub.f32 %v677, %v684
        %v692 = vsub.f32 %v678, %v685
        %v693 = vsub.f32 %v679, %v686
        %v694 = vsub.f32 %v680, %v687
        %v695 = vsub.f32 %v681, %v688
        %v696 = vmax.f32 %v689, 0.0
        %v697 = vmax.f32 %v690, 0.0
        %v698 = vmax.f32 %v691, 0.0
        %v699 = vmax.f32 %v692, 0.0
        %v700 = vmax.f32 %v693, 0.0
        %v701 = vmax.f32 %v694, 0.0
        %v702 = vmax.f32 %v695, 0.0
        %v703 = vsub.f32 %v608, %v640
        %v704 = vsub.f32 %v609, %v641
        %v705 = vsub.f32 %v610, %v642
        %v706 = vsub.f32 %v611, %v643
        %v707 = vsub.f32 %v612, %v644
        %v708 = vsub.f32 %v613, %v645
        %v709 = vsub.f32 %v614, %v646
        %v710 = vadd.f32 %v696, 1e-05
        %v711 = vadd.f32 %v697, 1e-05
        %v712 = vadd.f32 %v698, 1e-05
        %v713 = vadd.f32 %v699, 1e-05
        %v714 = vadd.f32 %v700, 1e-05
        %v715 = vadd.f32 %v701, 1e-05
        %v716 = vadd.f32 %v702, 1e-05
        %v717 = vrsqrt.pop %v710
        %v718 = vrsqrt.pop %v711
        %v719 = vrsqrt.pop %v712
        %v720 = vrsqrt.pop %v713
        %v721 = vrsqrt.pop %v714
        %v722 = vrsqrt.pop %v715
        %v723 = vrsqrt.pop %v716
        %v724 = vmul.f32 %v703, %v717
        %v725 = vmul.f32 %v704, %v718
        %v726 = vmul.f32 %v705, %v719
        %v727 = vmul.f32 %v706, %v720
        %v728 = vmul.f32 %v707, %v721
        %v729 = vmul.f32 %v708, %v722
        %v730 = vmul.f32 %v709, %v723
        %v731 = vlaneseq
        %v732 = vshrl.u32 %v731, 7
        %v733 = vsub.s32 0, %v732
        %v734 = vrot.slane %v615, %v733
        %v735 = vmul.f32 %v724, %v734
        %v736 = vmul.f32 %v725, %v734
        %v737 = vmul.f32 %v726, %v734
        %v738 = vmul.f32 %v727, %v734
        %v739 = vmul.f32 %v728, %v734
        %v740 = vmul.f32 %v729, %v734
        %v741 = vmul.f32 %v730, %v734
        %v742 = vlaneseq
        %v743 = vshrl.u32 %v742, 7
        %v744 = vsub.s32 0, %v743
        %v745 = vrot.slane %v616, %v744
        %v746 = vadd.f32 %v735, %v745
        %v747 = vadd.f32 %v736, %v745
        %v748 = vadd.f32 %v737, %v745
        %v749 = vadd.f32 %v738, %v745
        %v750 = vadd.f32 %v739, %v745
        %v751 = vadd.f32 %v740, %v745
        %v752 = vadd.f32 %v741, %v745
        %v753 = vld [vmem:[%s4 + $0x30] sm:$0xff]
        %v754 = vld [vmem:[%s4 + $0x38] sm:$0xff]
        %v755 = vld [vmem:[%s4 + $0x40] sm:$0xff]
        %v756 = vld [vmem:[%s4 + $0x48] sm:$0xff]
        %v757 = vld [vmem:[%s4 + $0x5] sm:$0x1]
        %v758 = vlaneseq
        %v759 = vshrl.u32 %v758, 7
        %v760 = vsub.s32 0, %v759
        %v761 = vrot.slane %v757, %v760
        %v763 = vsel %vm617, %v746, 0
        %v766 = vsel %vm617, %v747, 0
        %v769 = vsel %vm617, %v748, 0
        %v772 = vsel %vm617, %v749, 0
        %v775 = vsel %vm617, %v750, 0
        %v778 = vsel %vm617, %v751, 0
        %v781 = vsel %vm617, %v752, 0
        %783 = vmatprep.subr.mxu0 0.0
        %784 = vmatpush1.msra.mxu0 0.0
        %785 = vmatprep.subr.mxu0 0.0
        %786 = vmatpush1.msra.mxu0 0.0
        %787 = vmatprep.subr.mxu0 0.0
        %788 = vmatpush1.msra.mxu0 0.0
        %789 = vmatprep.subr.mxu0 0.0
        %790 = vmatpush1.msra.mxu0 0.0
        %791 = vmatprep.subr.mxu0 0.0
        %792 = vmatpush1.msra.mxu0 0.0
        %793 = vmatprep.subr.mxu0 0.0
        %794 = vmatpush1.msra.mxu0 0.0
        %795 = vmatprep.subr.mxu0 0.0
        %796 = vmatpush1.msra.mxu0 0.0
        %797 = vmatprep.subr.mxu0 0.0
        %798 = vmatpush1.msra.mxu0 0.0
        %799 = vmatprep.subr.mxu0 0.0
        %800 = vmatpush1.msra.mxu0 0.0
        %801 = vmatprep.subr.mxu0 0.0
        %802 = vmatpush1.msra.mxu0 0.0
        %803 = vmatprep.subr.mxu0 0.0
        %804 = vmatpush1.msra.mxu0 0.0
        %805 = vmatprep.subr.mxu0 0.0
        %806 = vmatpush1.msra.mxu0 0.0
        %807 = vmatprep.subr.mxu0 0.0
        %808 = vmatpush1.msra.mxu0 %v756
        %809 = vmatprep.subr.mxu0 0.0
        %810 = vmatpush1.msra.mxu0 %v755
        %811 = vmatprep.subr.mxu0 0.0
        %812 = vmatpush1.msra.mxu0 %v754
        %813 = vmatprep.subr.mxu0 0.0
        %814 = vmatpush1.msra.mxu0 %v753
        %815 = vmatprep.subr.mxu0 0.0
        %816 = vmatpush2.msra.mxu0 0.0
        %817 = vmatprep.subr.mxu0 0.0
        %818 = vmatpush2.msra.mxu0 0.0
        %819 = vmatprep.subr.mxu0 0.0
        %820 = vmatpush2.msra.mxu0 0.0
        %821 = vmatprep.subr.mxu0 0.0
        %822 = vmatpush2.msra.mxu0 0.0
        %823 = vmatprep.subr.mxu0 0.0
        %824 = vmatpush2.msra.mxu0 0.0
        %825 = vmatprep.subr.mxu0 0.0
        %826 = vmatpush2.msra.mxu0 0.0
        %827 = vmatprep.subr.mxu0 0.0
        %828 = vmatpush2.msra.mxu0 0.0
        %829 = vmatprep.subr.mxu0 0.0
        %830 = vmatpush2.msra.mxu0 0.0
        %831 = vmatprep.subr.mxu0 0.0
        %832 = vmatpush2.msra.mxu0 0.0
        %833 = vmatprep.subr.mxu0 0.0
        %834 = vmatpush2.msra.mxu0 0.0
        %835 = vmatprep.subr.mxu0 0.0
        %836 = vmatpush2.msra.mxu0 0.0
        %837 = vmatprep.subr.mxu0 0.0
        %838 = vmatpush2.msra.mxu0 0.0
        %839 = vmatprep.subr.mxu0 0.0
        %840 = vmatpush2.msra.mxu0 0.0
        %841 = vmatprep.subr.mxu0 0.0
        %842 = vmatpush2.msra.mxu0 0.0
        %843 = vmatprep.subr.mxu0 0.0
        %844 = vmatpush2.msra.mxu0 0.0
        %845 = vmatprep.subr.mxu0 0.0
        %846 = vmatpush2.msra.mxu0 0.0
        %847 = vmatprep.mubr.f32.mxu0 0.0
        %848 = vmatmul.mubr.f32.gmra.mxu0 %v763
        %v849 = vpop.f32.mrf.mxu0
        %v850 = vadd.f32 %v761, %v849
        %v851 = vpop.f32.mrf.mxu0
        %852 = vmatprep.mubr.f32.mxu0 0.0
        %853 = vmatmul.mubr.f32.gmra.mxu0 %v766
        %v854 = vpop.f32.mrf.mxu0
        %v855 = vadd.f32 %v761, %v854
        %v856 = vpop.f32.mrf.mxu0
        %857 = vmatprep.mubr.f32.mxu0 0.0
        %858 = vmatmul.mubr.f32.gmra.mxu0 %v769
        %v859 = vpop.f32.mrf.mxu0
        %v860 = vadd.f32 %v761, %v859
        %v861 = vpop.f32.mrf.mxu0
        %862 = vmatprep.mubr.f32.mxu0 0.0
        %863 = vmatmul.mubr.f32.gmra.mxu0 %v772
        %v864 = vpop.f32.mrf.mxu0
        %v865 = vadd.f32 %v761, %v864
        %v866 = vpop.f32.mrf.mxu0
        %867 = vmatprep.mubr.f32.mxu0 0.0
        %868 = vmatmul.mubr.f32.gmra.mxu0 %v775
        %v869 = vpop.f32.mrf.mxu0
        %v870 = vadd.f32 %v761, %v869
        %v871 = vpop.f32.mrf.mxu0
        %872 = vmatprep.mubr.f32.mxu0 0.0
        %873 = vmatmul.mubr.f32.gmra.mxu0 %v778
        %v874 = vpop.f32.mrf.mxu0
        %v875 = vadd.f32 %v761, %v874
        %v876 = vpop.f32.mrf.mxu0
        %877 = vmatprep.mubr.f32.mxu0 0.0
        %878 = vmatmul.mubr.f32.gmra.mxu0 %v781
        %v879 = vpop.f32.mrf.mxu0
        %v880 = vadd.f32 %v761, %v879
        %v881 = vpop.f32.mrf.mxu0
        %882 = vdwg.mxu0
        %v883 = vmax.f32 %v850, 0.0
        %v884 = vmax.f32 %v855, 0.0
        %v885 = vmax.f32 %v860, 0.0
        %v886 = vmax.f32 %v865, 0.0
        %v887 = vmax.f32 %v870, 0.0
        %v888 = vmax.f32 %v875, 0.0
        %v889 = vmax.f32 %v880, 0.0
        %v890 = vld [vmem:[%s4 + $0x6] sm:$0x1]
        %v891 = vld [vmem:[%s4 + $0x7] sm:$0x1]
        %v892 = vsel %vm617, %v883, 0.0
        %893 = vadd.xlane.f32.xlu0 %v892
        %v894 = vpop.xlane.xlu0 %893
        %v895 = vsel %vm617, %v884, 0.0
        %896 = vadd.xlane.f32.xlu0 %v895
        %v897 = vpop.xlane.xlu0 %896
        %v898 = vsel %vm617, %v885, 0.0
        %899 = vadd.xlane.f32.xlu0 %v898
        %v900 = vpop.xlane.xlu0 %899
        %v901 = vsel %vm617, %v886, 0.0
        %902 = vadd.xlane.f32.xlu0 %v901
        %v903 = vpop.xlane.xlu0 %902
        %v904 = vsel %vm617, %v887, 0.0
        %905 = vadd.xlane.f32.xlu0 %v904
        %v906 = vpop.xlane.xlu0 %905
        %v907 = vsel %vm617, %v888, 0.0
        %908 = vadd.xlane.f32.xlu0 %v907
        %v909 = vpop.xlane.xlu0 %908
        %v910 = vsel %vm617, %v889, 0.0
        %911 = vadd.xlane.f32.xlu0 %v910
        %v912 = vpop.xlane.xlu0 %911
        %v913 = vmul.f32 %v894, %v639
        %v914 = vmul.f32 %v897, %v639
        %v915 = vmul.f32 %v900, %v639
        %v916 = vmul.f32 %v903, %v639
        %v917 = vmul.f32 %v906, %v639
        %v918 = vmul.f32 %v909, %v639
        %v919 = vmul.f32 %v912, %v639
        %v920 = vmul.f32 %v883, %v883
        %v921 = vmul.f32 %v884, %v884
        %v922 = vmul.f32 %v885, %v885
        %v923 = vmul.f32 %v886, %v886
        %v924 = vmul.f32 %v887, %v887
        %v925 = vmul.f32 %v888, %v888
        %v926 = vmul.f32 %v889, %v889
        %v927 = vsel %vm617, %v920, 0.0
        %928 = vadd.xlane.f32.xlu0 %v927
        %v929 = vpop.xlane.xlu0 %928
        %v930 = vsel %vm617, %v921, 0.0
        %931 = vadd.xlane.f32.xlu0 %v930
        %v932 = vpop.xlane.xlu0 %931
        %v933 = vsel %vm617, %v922, 0.0
        %934 = vadd.xlane.f32.xlu0 %v933
        %v935 = vpop.xlane.xlu0 %934
        %v936 = vsel %vm617, %v923, 0.0
        %937 = vadd.xlane.f32.xlu0 %v936
        %v938 = vpop.xlane.xlu0 %937
        %v939 = vsel %vm617, %v924, 0.0
        %940 = vadd.xlane.f32.xlu0 %v939
        %v941 = vpop.xlane.xlu0 %940
        %v942 = vsel %vm617, %v925, 0.0
        %943 = vadd.xlane.f32.xlu0 %v942
        %v944 = vpop.xlane.xlu0 %943
        %v945 = vsel %vm617, %v926, 0.0
        %946 = vadd.xlane.f32.xlu0 %v945
        %v947 = vpop.xlane.xlu0 %946
        %v948 = vmul.f32 %v929, %v639
        %v949 = vmul.f32 %v932, %v639
        %v950 = vmul.f32 %v935, %v639
        %v951 = vmul.f32 %v938, %v639
        %v952 = vmul.f32 %v941, %v639
        %v953 = vmul.f32 %v944, %v639
        %v954 = vmul.f32 %v947, %v639
        %v955 = vmul.f32 %v913, %v913
        %v956 = vmul.f32 %v914, %v914
        %v957 = vmul.f32 %v915, %v915
        %v958 = vmul.f32 %v916, %v916
        %v959 = vmul.f32 %v917, %v917
        %v960 = vmul.f32 %v918, %v918
        %v961 = vmul.f32 %v919, %v919
        %v962 = vsub.f32 %v948, %v955
        %v963 = vsub.f32 %v949, %v956
        %v964 = vsub.f32 %v950, %v957
        %v965 = vsub.f32 %v951, %v958
        %v966 = vsub.f32 %v952, %v959
        %v967 = vsub.f32 %v953, %v960
        %v968 = vsub.f32 %v954, %v961
        %v969 = vmax.f32 %v962, 0.0
        %v970 = vmax.f32 %v963, 0.0
        %v971 = vmax.f32 %v964, 0.0
        %v972 = vmax.f32 %v965, 0.0
        %v973 = vmax.f32 %v966, 0.0
        %v974 = vmax.f32 %v967, 0.0
        %v975 = vmax.f32 %v968, 0.0
        %v976 = vsub.f32 %v883, %v913
        %v977 = vsub.f32 %v884, %v914
        %v978 = vsub.f32 %v885, %v915
        %v979 = vsub.f32 %v886, %v916
        %v980 = vsub.f32 %v887, %v917
        %v981 = vsub.f32 %v888, %v918
        %v982 = vsub.f32 %v889, %v919
        %v983 = vadd.f32 %v969, 1e-05
        %v984 = vadd.f32 %v970, 1e-05
        %v985 = vadd.f32 %v971, 1e-05
        %v986 = vadd.f32 %v972, 1e-05
        %v987 = vadd.f32 %v973, 1e-05
        %v988 = vadd.f32 %v974, 1e-05
        %v989 = vadd.f32 %v975, 1e-05
        %v990 = vrsqrt.pop %v983
        %v991 = vrsqrt.pop %v984
        %v992 = vrsqrt.pop %v985
        %v993 = vrsqrt.pop %v986
        %v994 = vrsqrt.pop %v987
        %v995 = vrsqrt.pop %v988
        %v996 = vrsqrt.pop %v989
        %v997 = vmul.f32 %v976, %v990
        %v998 = vmul.f32 %v977, %v991
        %v999 = vmul.f32 %v978, %v992
        %v1000 = vmul.f32 %v979, %v993
        %v1001 = vmul.f32 %v980, %v994
        %v1002 = vmul.f32 %v981, %v995
        %v1003 = vmul.f32 %v982, %v996
        %v1004 = vlaneseq
        %v1005 = vshrl.u32 %v1004, 7
        %v1006 = vsub.s32 0, %v1005
        %v1007 = vrot.slane %v890, %v1006
        %v1008 = vmul.f32 %v997, %v1007
        %v1009 = vmul.f32 %v998, %v1007
        %v1010 = vmul.f32 %v999, %v1007
        %v1011 = vmul.f32 %v1000, %v1007
        %v1012 = vmul.f32 %v1001, %v1007
        %v1013 = vmul.f32 %v1002, %v1007
        %v1014 = vmul.f32 %v1003, %v1007
        %v1015 = vlaneseq
        %v1016 = vshrl.u32 %v1015, 7
        %v1017 = vsub.s32 0, %v1016
        %v1018 = vrot.slane %v891, %v1017
        %v1019 = vadd.f32 %v1008, %v1018
        %v1020 = vadd.f32 %v1009, %v1018
        %v1021 = vadd.f32 %v1010, %v1018
        %v1022 = vadd.f32 %v1011, %v1018
        %v1023 = vadd.f32 %v1012, %v1018
        %v1024 = vadd.f32 %v1013, %v1018
        %v1025 = vadd.f32 %v1014, %v1018
        %1027 = vset.pattern.permute.xlu0 0
        %1028 = vperm.xlu0 %1027, %v327
        %v1029 = vpop.permute.xlu0 %1028
        %1032 = vset.pattern.permute.xlu0 0
        %1033 = vperm.xlu0 %1032, %v328
        %v1034 = vpop.permute.xlu0 %1033
        %1037 = vset.pattern.permute.xlu0 0
        %1038 = vperm.xlu0 %1037, %v329
        %v1039 = vpop.permute.xlu0 %1038
        %1042 = vset.pattern.permute.xlu0 0
        %1043 = vperm.xlu0 %1042, %v330
        %v1044 = vpop.permute.xlu0 %1043
        %1047 = vset.pattern.permute.xlu0 0
        %1048 = vperm.xlu0 %1047, %v331
        %v1049 = vpop.permute.xlu0 %1048
        %1052 = vset.pattern.permute.xlu0 0
        %1053 = vperm.xlu0 %1052, %v332
        %v1054 = vpop.permute.xlu0 %1053
        %1057 = vset.pattern.permute.xlu0 0
        %1058 = vperm.xlu0 %1057, %v333
        %v1059 = vpop.permute.xlu0 %1058
        %v1061 = vmul.f32 %v320, %v1029
        %v1062 = vmul.f32 %v321, %v1034
        %v1063 = vmul.f32 %v322, %v1039
        %v1064 = vmul.f32 %v323, %v1044
        %v1065 = vmul.f32 %v324, %v1049
        %v1066 = vmul.f32 %v325, %v1054
        %v1067 = vmul.f32 %v326, %v1059
        %v1068 = vld [vmem:[%s4 + $0x50] sm:$0xff]
        %v1069 = vld [vmem:[%s4 + $0x58] sm:$0xff]
        %v1070 = vld [vmem:[%s4 + $0x60] sm:$0xff]
        %v1071 = vld [vmem:[%s4 + $0x68] sm:$0xff]
        %v1072 = vld [vmem:[%s4 + $0x8] sm:$0x1]
        %v1073 = vlaneseq
        %v1074 = vshrl.u32 %v1073, 7
        %v1075 = vsub.s32 0, %v1074
        %v1076 = vrot.slane %v1072, %v1075
        %v1078 = vsel %vm617, %v1019, 0
        %v1081 = vsel %vm617, %v1020, 0
        %v1084 = vsel %vm617, %v1021, 0
        %v1087 = vsel %vm617, %v1022, 0
        %v1090 = vsel %vm617, %v1023, 0
        %v1093 = vsel %vm617, %v1024, 0
        %v1096 = vsel %vm617, %v1025, 0
        %1098 = vmatprep.subr.mxu0 0.0
        %1099 = vmatpush1.msra.mxu0 0.0
        %1100 = vmatprep.subr.mxu0 0.0
        %1101 = vmatpush1.msra.mxu0 0.0
        %1102 = vmatprep.subr.mxu0 0.0
        %1103 = vmatpush1.msra.mxu0 0.0
        %1104 = vmatprep.subr.mxu0 0.0
        %1105 = vmatpush1.msra.mxu0 0.0
        %1106 = vmatprep.subr.mxu0 0.0
        %1107 = vmatpush1.msra.mxu0 0.0
        %1108 = vmatprep.subr.mxu0 0.0
        %1109 = vmatpush1.msra.mxu0 0.0
        %1110 = vmatprep.subr.mxu0 0.0
        %1111 = vmatpush1.msra.mxu0 0.0
        %1112 = vmatprep.subr.mxu0 0.0
        %1113 = vmatpush1.msra.mxu0 0.0
        %1114 = vmatprep.subr.mxu0 0.0
        %1115 = vmatpush1.msra.mxu0 0.0
        %1116 = vmatprep.subr.mxu0 0.0
        %1117 = vmatpush1.msra.mxu0 0.0
        %1118 = vmatprep.subr.mxu0 0.0
        %1119 = vmatpush1.msra.mxu0 0.0
        %1120 = vmatprep.subr.mxu0 0.0
        %1121 = vmatpush1.msra.mxu0 0.0
        %1122 = vmatprep.subr.mxu0 0.0
        %1123 = vmatpush1.msra.mxu0 %v1071
        %1124 = vmatprep.subr.mxu0 0.0
        %1125 = vmatpush1.msra.mxu0 %v1070
        %1126 = vmatprep.subr.mxu0 0.0
        %1127 = vmatpush1.msra.mxu0 %v1069
        %1128 = vmatprep.subr.mxu0 0.0
        %1129 = vmatpush1.msra.mxu0 %v1068
        %1130 = vmatprep.subr.mxu0 0.0
        %1131 = vmatpush2.msra.mxu0 0.0
        %1132 = vmatprep.subr.mxu0 0.0
        %1133 = vmatpush2.msra.mxu0 0.0
        %1134 = vmatprep.subr.mxu0 0.0
        %1135 = vmatpush2.msra.mxu0 0.0
        %1136 = vmatprep.subr.mxu0 0.0
        %1137 = vmatpush2.msra.mxu0 0.0
        %1138 = vmatprep.subr.mxu0 0.0
        %1139 = vmatpush2.msra.mxu0 0.0
        %1140 = vmatprep.subr.mxu0 0.0
        %1141 = vmatpush2.msra.mxu0 0.0
        %1142 = vmatprep.subr.mxu0 0.0
        %1143 = vmatpush2.msra.mxu0 0.0
        %1144 = vmatprep.subr.mxu0 0.0
        %1145 = vmatpush2.msra.mxu0 0.0
        %1146 = vmatprep.subr.mxu0 0.0
        %1147 = vmatpush2.msra.mxu0 0.0
        %1148 = vmatprep.subr.mxu0 0.0
        %1149 = vmatpush2.msra.mxu0 0.0
        %1150 = vmatprep.subr.mxu0 0.0
        %1151 = vmatpush2.msra.mxu0 0.0
        %1152 = vmatprep.subr.mxu0 0.0
        %1153 = vmatpush2.msra.mxu0 0.0
        %1154 = vmatprep.subr.mxu0 0.0
        %1155 = vmatpush2.msra.mxu0 0.0
        %1156 = vmatprep.subr.mxu0 0.0
        %1157 = vmatpush2.msra.mxu0 0.0
        %1158 = vmatprep.subr.mxu0 0.0
        %1159 = vmatpush2.msra.mxu0 0.0
        %1160 = vmatprep.subr.mxu0 0.0
        %1161 = vmatpush2.msra.mxu0 0.0
        %1162 = vmatprep.mubr.f32.mxu0 0.0
        %1163 = vmatmul.mubr.f32.gmra.mxu0 %v1078
        %v1164 = vpop.f32.mrf.mxu0
        %v1165 = vadd.f32 %v1076, %v1164
        %v1166 = vpop.f32.mrf.mxu0
        %1167 = vmatprep.mubr.f32.mxu0 0.0
        %1168 = vmatmul.mubr.f32.gmra.mxu0 %v1081
        %v1169 = vpop.f32.mrf.mxu0
        %v1170 = vadd.f32 %v1076, %v1169
        %v1171 = vpop.f32.mrf.mxu0
        %1172 = vmatprep.mubr.f32.mxu0 0.0
        %1173 = vmatmul.mubr.f32.gmra.mxu0 %v1084
        %v1174 = vpop.f32.mrf.mxu0
        %v1175 = vadd.f32 %v1076, %v1174
        %v1176 = vpop.f32.mrf.mxu0
        %1177 = vmatprep.mubr.f32.mxu0 0.0
        %1178 = vmatmul.mubr.f32.gmra.mxu0 %v1087
        %v1179 = vpop.f32.mrf.mxu0
        %v1180 = vadd.f32 %v1076, %v1179
        %v1181 = vpop.f32.mrf.mxu0
        %1182 = vmatprep.mubr.f32.mxu0 0.0
        %1183 = vmatmul.mubr.f32.gmra.mxu0 %v1090
        %v1184 = vpop.f32.mrf.mxu0
        %v1185 = vadd.f32 %v1076, %v1184
        %v1186 = vpop.f32.mrf.mxu0
        %1187 = vmatprep.mubr.f32.mxu0 0.0
        %1188 = vmatmul.mubr.f32.gmra.mxu0 %v1093
        %v1189 = vpop.f32.mrf.mxu0
        %v1190 = vadd.f32 %v1076, %v1189
        %v1191 = vpop.f32.mrf.mxu0
        %1192 = vmatprep.mubr.f32.mxu0 0.0
        %1193 = vmatmul.mubr.f32.gmra.mxu0 %v1096
        %v1194 = vpop.f32.mrf.mxu0
        %v1195 = vadd.f32 %v1076, %v1194
        %v1196 = vpop.f32.mrf.mxu0
        %1197 = vdwg.mxu0
        %v1198 = vld [vmem:[%s4 + $0x70] sm:$0xff]
        %v1199 = vld [vmem:[%s4 + $0x78] sm:$0xff]
        %v1200 = vld [vmem:[%s4 + $0x80] sm:$0xff]
        %v1201 = vld [vmem:[%s4 + $0x88] sm:$0xff]
        %v1202 = vld [vmem:[%s4 + $0x9] sm:$0x1]
        %v1203 = vlaneseq
        %v1204 = vshrl.u32 %v1203, 7
        %v1205 = vsub.s32 0, %v1204
        %v1206 = vrot.slane %v1202, %v1205
        %v1208 = vsel %vm617, %v1061, 0
        %v1211 = vsel %vm617, %v1062, 0
        %v1214 = vsel %vm617, %v1063, 0
        %v1217 = vsel %vm617, %v1064, 0
        %v1220 = vsel %vm617, %v1065, 0
        %v1223 = vsel %vm617, %v1066, 0
        %v1226 = vsel %vm617, %v1067, 0
        %1228 = vmatprep.subr.mxu0 0.0
        %1229 = vmatpush1.msra.mxu0 0.0
        %1230 = vmatprep.subr.mxu0 0.0
        %1231 = vmatpush1.msra.mxu0 0.0
        %1232 = vmatprep.subr.mxu0 0.0
        %1233 = vmatpush1.msra.mxu0 0.0
        %1234 = vmatprep.subr.mxu0 0.0
        %1235 = vmatpush1.msra.mxu0 0.0
        %1236 = vmatprep.subr.mxu0 0.0
        %1237 = vmatpush1.msra.mxu0 0.0
        %1238 = vmatprep.subr.mxu0 0.0
        %1239 = vmatpush1.msra.mxu0 0.0
        %1240 = vmatprep.subr.mxu0 0.0
        %1241 = vmatpush1.msra.mxu0 0.0
        %1242 = vmatprep.subr.mxu0 0.0
        %1243 = vmatpush1.msra.mxu0 0.0
        %1244 = vmatprep.subr.mxu0 0.0
        %1245 = vmatpush1.msra.mxu0 0.0
        %1246 = vmatprep.subr.mxu0 0.0
        %1247 = vmatpush1.msra.mxu0 0.0
        %1248 = vmatprep.subr.mxu0 0.0
        %1249 = vmatpush1.msra.mxu0 0.0
        %1250 = vmatprep.subr.mxu0 0.0
        %1251 = vmatpush1.msra.mxu0 0.0
        %1252 = vmatprep.subr.mxu0 0.0
        %1253 = vmatpush1.msra.mxu0 %v1201
        %1254 = vmatprep.subr.mxu0 0.0
        %1255 = vmatpush1.msra.mxu0 %v1200
        %1256 = vmatprep.subr.mxu0 0.0
        %1257 = vmatpush1.msra.mxu0 %v1199
        %1258 = vmatprep.subr.mxu0 0.0
        %1259 = vmatpush1.msra.mxu0 %v1198
        %1260 = vmatprep.subr.mxu0 0.0
        %1261 = vmatpush2.msra.mxu0 0.0
        %1262 = vmatprep.subr.mxu0 0.0
        %1263 = vmatpush2.msra.mxu0 0.0
        %1264 = vmatprep.subr.mxu0 0.0
        %1265 = vmatpush2.msra.mxu0 0.0
        %1266 = vmatprep.subr.mxu0 0.0
        %1267 = vmatpush2.msra.mxu0 0.0
        %1268 = vmatprep.subr.mxu0 0.0
        %1269 = vmatpush2.msra.mxu0 0.0
        %1270 = vmatprep.subr.mxu0 0.0
        %1271 = vmatpush2.msra.mxu0 0.0
        %1272 = vmatprep.subr.mxu0 0.0
        %1273 = vmatpush2.msra.mxu0 0.0
        %1274 = vmatprep.subr.mxu0 0.0
        %1275 = vmatpush2.msra.mxu0 0.0
        %1276 = vmatprep.subr.mxu0 0.0
        %1277 = vmatpush2.msra.mxu0 0.0
        %1278 = vmatprep.subr.mxu0 0.0
        %1279 = vmatpush2.msra.mxu0 0.0
        %1280 = vmatprep.subr.mxu0 0.0
        %1281 = vmatpush2.msra.mxu0 0.0
        %1282 = vmatprep.subr.mxu0 0.0
        %1283 = vmatpush2.msra.mxu0 0.0
        %1284 = vmatprep.subr.mxu0 0.0
        %1285 = vmatpush2.msra.mxu0 0.0
        %1286 = vmatprep.subr.mxu0 0.0
        %1287 = vmatpush2.msra.mxu0 0.0
        %1288 = vmatprep.subr.mxu0 0.0
        %1289 = vmatpush2.msra.mxu0 0.0
        %1290 = vmatprep.subr.mxu0 0.0
        %1291 = vmatpush2.msra.mxu0 0.0
        %1292 = vmatprep.mubr.f32.mxu0 0.0
        %1293 = vmatmul.mubr.f32.gmra.mxu0 %v1208
        %v1294 = vpop.f32.mrf.mxu0
        %v1295 = vadd.f32 %v1206, %v1294
        %v1296 = vpop.f32.mrf.mxu0
        %1297 = vmatprep.mubr.f32.mxu0 0.0
        %1298 = vmatmul.mubr.f32.gmra.mxu0 %v1211
        %v1299 = vpop.f32.mrf.mxu0
        %v1300 = vadd.f32 %v1206, %v1299
        %v1301 = vpop.f32.mrf.mxu0
        %1302 = vmatprep.mubr.f32.mxu0 0.0
        %1303 = vmatmul.mubr.f32.gmra.mxu0 %v1214
        %v1304 = vpop.f32.mrf.mxu0
        %v1305 = vadd.f32 %v1206, %v1304
        %v1306 = vpop.f32.mrf.mxu0
        %1307 = vmatprep.mubr.f32.mxu0 0.0
        %1308 = vmatmul.mubr.f32.gmra.mxu0 %v1217
        %v1309 = vpop.f32.mrf.mxu0
        %v1310 = vadd.f32 %v1206, %v1309
        %v1311 = vpop.f32.mrf.mxu0
        %1312 = vmatprep.mubr.f32.mxu0 0.0
        %1313 = vmatmul.mubr.f32.gmra.mxu0 %v1220
        %v1314 = vpop.f32.mrf.mxu0
        %v1315 = vadd.f32 %v1206, %v1314
        %v1316 = vpop.f32.mrf.mxu0
        %1317 = vmatprep.mubr.f32.mxu0 0.0
        %1318 = vmatmul.mubr.f32.gmra.mxu0 %v1223
        %v1319 = vpop.f32.mrf.mxu0
        %v1320 = vadd.f32 %v1206, %v1319
        %v1321 = vpop.f32.mrf.mxu0
        %1322 = vmatprep.mubr.f32.mxu0 0.0
        %1323 = vmatmul.mubr.f32.gmra.mxu0 %v1226
        %v1324 = vpop.f32.mrf.mxu0
        %v1325 = vadd.f32 %v1206, %v1324
        %v1326 = vpop.f32.mrf.mxu0
        %1327 = vdwg.mxu0
        %v1328 = vadd.f32 %v1165, %v1295
        %v1329 = vadd.f32 %v1170, %v1300
        %v1330 = vadd.f32 %v1175, %v1305
        %v1331 = vadd.f32 %v1180, %v1310
        %v1332 = vadd.f32 %v1185, %v1315
        %v1333 = vadd.f32 %v1190, %v1320
        %v1334 = vadd.f32 %v1195, %v1325
        %v1335 = vxor.u32 %v1328, 2147483648
        %v1336 = vxor.u32 %v1329, 2147483648
        %v1337 = vxor.u32 %v1330, 2147483648
        %v1338 = vxor.u32 %v1331, 2147483648
        %v1339 = vxor.u32 %v1332, 2147483648
        %v1340 = vxor.u32 %v1333, 2147483648
        %v1341 = vxor.u32 %v1334, 2147483648
        %v1342 = vmul.f32 %v1335, 1.442695
        %v1343 = vpow.pop %v1342
        %v1344 = vmul.f32 %v1336, 1.442695
        %v1345 = vpow.pop %v1344
        %v1346 = vmul.f32 %v1337, 1.442695
        %v1347 = vpow.pop %v1346
        %v1348 = vmul.f32 %v1338, 1.442695
        %v1349 = vpow.pop %v1348
        %v1350 = vmul.f32 %v1339, 1.442695
        %v1351 = vpow.pop %v1350
        %v1352 = vmul.f32 %v1340, 1.442695
        %v1353 = vpow.pop %v1352
        %v1354 = vmul.f32 %v1341, 1.442695
        %v1355 = vpow.pop %v1354
        %v1356 = vadd.f32 %v1343, 1.0
        %v1357 = vadd.f32 %v1345, 1.0
        %v1358 = vadd.f32 %v1347, 1.0
        %v1359 = vadd.f32 %v1349, 1.0
        %v1360 = vadd.f32 %v1351, 1.0
        %v1361 = vadd.f32 %v1353, 1.0
        %v1362 = vadd.f32 %v1355, 1.0
        %v1363 = vrcp.pop %v1356
        %v1364 = vmul.f32 1.0, %v1363
        %v1365 = vrcp.pop %v1357
        %v1366 = vmul.f32 1.0, %v1365
        %v1367 = vrcp.pop %v1358
        %v1368 = vmul.f32 1.0, %v1367
        %v1369 = vrcp.pop %v1359
        %v1370 = vmul.f32 1.0, %v1369
        %v1371 = vrcp.pop %v1360
        %v1372 = vmul.f32 1.0, %v1371
        %v1373 = vrcp.pop %v1361
        %v1374 = vmul.f32 1.0, %v1373
        %v1375 = vrcp.pop %v1362
        %v1376 = vmul.f32 1.0, %v1375
        %1384 = vrot.lane.b32.xlu0 %v1295, 64
        %v1385 = vpop.permute.xlu0 %1384
        %1386 = vrot.lane.b32.xlu0 %v1300, 64
        %v1387 = vpop.permute.xlu0 %1386
        %1388 = vrot.lane.b32.xlu0 %v1305, 64
        %v1389 = vpop.permute.xlu0 %1388
        %1390 = vrot.lane.b32.xlu0 %v1310, 64
        %v1391 = vpop.permute.xlu0 %1390
        %1392 = vrot.lane.b32.xlu0 %v1315, 64
        %v1393 = vpop.permute.xlu0 %1392
        %1394 = vrot.lane.b32.xlu0 %v1320, 64
        %v1395 = vpop.permute.xlu0 %1394
        %1396 = vrot.lane.b32.xlu0 %v1325, 64
        %v1397 = vpop.permute.xlu0 %1396
        %v1405 = vmul.f32 %v1364, %v1385
        %v1406 = vmul.f32 %v1366, %v1387
        %v1407 = vmul.f32 %v1368, %v1389
        %v1408 = vmul.f32 %v1370, %v1391
        %v1409 = vmul.f32 %v1372, %v1393
        %v1410 = vmul.f32 %v1374, %v1395
        %v1411 = vmul.f32 %v1376, %v1397
        %1419 = vrot.lane.b32.xlu0 %v1405, 64
        %v1420 = vpop.permute.xlu0 %1419
        %1421 = vrot.lane.b32.xlu0 %v1406, 64
        %v1422 = vpop.permute.xlu0 %1421
        %1423 = vrot.lane.b32.xlu0 %v1407, 64
        %v1424 = vpop.permute.xlu0 %1423
        %1425 = vrot.lane.b32.xlu0 %v1408, 64
        %v1426 = vpop.permute.xlu0 %1425
        %1427 = vrot.lane.b32.xlu0 %v1409, 64
        %v1428 = vpop.permute.xlu0 %1427
        %1429 = vrot.lane.b32.xlu0 %v1410, 64
        %v1430 = vpop.permute.xlu0 %1429
        %1431 = vrot.lane.b32.xlu0 %v1411, 64
        %v1432 = vpop.permute.xlu0 %1431
        %v1440 = vadd.f32 %v1165, %v1420
        %v1441 = vadd.f32 %v1170, %v1422
        %v1442 = vadd.f32 %v1175, %v1424
        %v1443 = vadd.f32 %v1180, %v1426
        %v1444 = vadd.f32 %v1185, %v1428
        %v1445 = vadd.f32 %v1190, %v1430
        %v1446 = vadd.f32 %v1195, %v1432
        %v1447 = vtanh.pop %v1440
        %v1448 = vtanh.pop %v1441
        %v1449 = vtanh.pop %v1442
        %v1450 = vtanh.pop %v1443
        %v1451 = vtanh.pop %v1444
        %v1452 = vtanh.pop %v1445
        %v1453 = vtanh.pop %v1446
        %v1454 = vsub.f32 1.0, %v1364
        %v1455 = vsub.f32 1.0, %v1366
        %v1456 = vsub.f32 1.0, %v1368
        %v1457 = vsub.f32 1.0, %v1370
        %v1458 = vsub.f32 1.0, %v1372
        %v1459 = vsub.f32 1.0, %v1374
        %v1460 = vsub.f32 1.0, %v1376
        %1468 = vrot.lane.b32.xlu0 %v1447, 96
        %v1469 = vpop.permute.xlu0 %1468
        %1470 = vrot.lane.b32.xlu0 %v1448, 96
        %v1471 = vpop.permute.xlu0 %1470
        %1472 = vrot.lane.b32.xlu0 %v1449, 96
        %v1473 = vpop.permute.xlu0 %1472
        %1474 = vrot.lane.b32.xlu0 %v1450, 96
        %v1475 = vpop.permute.xlu0 %1474
        %1476 = vrot.lane.b32.xlu0 %v1451, 96
        %v1477 = vpop.permute.xlu0 %1476
        %1478 = vrot.lane.b32.xlu0 %v1452, 96
        %v1479 = vpop.permute.xlu0 %1478
        %1480 = vrot.lane.b32.xlu0 %v1453, 96
        %v1481 = vpop.permute.xlu0 %1480
        %v1489 = vmul.f32 %v1454, %v1469
        %v1490 = vmul.f32 %v1455, %v1471
        %v1491 = vmul.f32 %v1456, %v1473
        %v1492 = vmul.f32 %v1457, %v1475
        %v1493 = vmul.f32 %v1458, %v1477
        %v1494 = vmul.f32 %v1459, %v1479
        %v1495 = vmul.f32 %v1460, %v1481
        %1496 = vrot.lane.b32.xlu0 %v1061, 32
        %v1497 = vpop.permute.xlu0 %1496
        %1498 = vrot.lane.b32.xlu0 %v1062, 32
        %v1499 = vpop.permute.xlu0 %1498
        %1500 = vrot.lane.b32.xlu0 %v1063, 32
        %v1501 = vpop.permute.xlu0 %1500
        %1502 = vrot.lane.b32.xlu0 %v1064, 32
        %v1503 = vpop.permute.xlu0 %1502
        %1504 = vrot.lane.b32.xlu0 %v1065, 32
        %v1505 = vpop.permute.xlu0 %1504
        %1506 = vrot.lane.b32.xlu0 %v1066, 32
        %v1507 = vpop.permute.xlu0 %1506
        %1508 = vrot.lane.b32.xlu0 %v1067, 32
        %v1509 = vpop.permute.xlu0 %1508
        %v1517 = vmul.f32 %v1364, %v1497
        %v1518 = vmul.f32 %v1366, %v1499
        %v1519 = vmul.f32 %v1368, %v1501
        %v1520 = vmul.f32 %v1370, %v1503
        %v1521 = vmul.f32 %v1372, %v1505
        %v1522 = vmul.f32 %v1374, %v1507
        %v1523 = vmul.f32 %v1376, %v1509
        %v1524 = vadd.f32 %v1489, %v1517
        %v1525 = vadd.f32 %v1490, %v1518
        %v1526 = vadd.f32 %v1491, %v1519
        %v1527 = vadd.f32 %v1492, %v1520
        %v1528 = vadd.f32 %v1493, %v1521
        %v1529 = vadd.f32 %v1494, %v1522
        %v1530 = vadd.f32 %v1495, %v1523
        %v1531 = vld [vmem:[%s4 + $0xa] sm:$0x1]
        %v1532 = vld [vmem:[%s4 + $0xb] sm:$0x1]
        %1540 = vrot.lane.b32.xlu0 %v1524, 96
        %v1541 = vpop.permute.xlu0 %1540
        %1542 = vrot.lane.b32.xlu0 %v1525, 96
        %v1543 = vpop.permute.xlu0 %1542
        %1544 = vrot.lane.b32.xlu0 %v1526, 96
        %v1545 = vpop.permute.xlu0 %1544
        %1546 = vrot.lane.b32.xlu0 %v1527, 96
        %v1547 = vpop.permute.xlu0 %1546
        %1548 = vrot.lane.b32.xlu0 %v1528, 96
        %v1549 = vpop.permute.xlu0 %1548
        %1550 = vrot.lane.b32.xlu0 %v1529, 96
        %v1551 = vpop.permute.xlu0 %1550
        %1552 = vrot.lane.b32.xlu0 %v1530, 96
        %v1553 = vpop.permute.xlu0 %1552
        %v1561 = vsel %vm617, %v1541, 0.0
        %1562 = vadd.xlane.f32.xlu0 %v1561
        %v1563 = vpop.xlane.xlu0 %1562
        %v1564 = vsel %vm617, %v1543, 0.0
        %1565 = vadd.xlane.f32.xlu0 %v1564
        %v1566 = vpop.xlane.xlu0 %1565
        %v1567 = vsel %vm617, %v1545, 0.0
        %1568 = vadd.xlane.f32.xlu0 %v1567
        %v1569 = vpop.xlane.xlu0 %1568
        %v1570 = vsel %vm617, %v1547, 0.0
        %1571 = vadd.xlane.f32.xlu0 %v1570
        %v1572 = vpop.xlane.xlu0 %1571
        %v1573 = vsel %vm617, %v1549, 0.0
        %1574 = vadd.xlane.f32.xlu0 %v1573
        %v1575 = vpop.xlane.xlu0 %1574
        %v1576 = vsel %vm617, %v1551, 0.0
        %1577 = vadd.xlane.f32.xlu0 %v1576
        %v1578 = vpop.xlane.xlu0 %1577
        %v1579 = vsel %vm617, %v1553, 0.0
        %1580 = vadd.xlane.f32.xlu0 %v1579
        %v1581 = vpop.xlane.xlu0 %1580
        %v1582 = vmul.f32 %v1563, %v639
        %v1583 = vmul.f32 %v1566, %v639
        %v1584 = vmul.f32 %v1569, %v639
        %v1585 = vmul.f32 %v1572, %v639
        %v1586 = vmul.f32 %v1575, %v639
        %v1587 = vmul.f32 %v1578, %v639
        %v1588 = vmul.f32 %v1581, %v639
        %v1589 = vmul.f32 %v1524, %v1524
        %v1590 = vmul.f32 %v1525, %v1525
        %v1591 = vmul.f32 %v1526, %v1526
        %v1592 = vmul.f32 %v1527, %v1527
        %v1593 = vmul.f32 %v1528, %v1528
        %v1594 = vmul.f32 %v1529, %v1529
        %v1595 = vmul.f32 %v1530, %v1530
        %1603 = vrot.lane.b32.xlu0 %v1589, 96
        %v1604 = vpop.permute.xlu0 %1603
        %1605 = vrot.lane.b32.xlu0 %v1590, 96
        %v1606 = vpop.permute.xlu0 %1605
        %1607 = vrot.lane.b32.xlu0 %v1591, 96
        %v1608 = vpop.permute.xlu0 %1607
        %1609 = vrot.lane.b32.xlu0 %v1592, 96
        %v1610 = vpop.permute.xlu0 %1609
        %1611 = vrot.lane.b32.xlu0 %v1593, 96
        %v1612 = vpop.permute.xlu0 %1611
        %1613 = vrot.lane.b32.xlu0 %v1594, 96
        %v1614 = vpop.permute.xlu0 %1613
        %1615 = vrot.lane.b32.xlu0 %v1595, 96
        %v1616 = vpop.permute.xlu0 %1615
        %v1624 = vsel %vm617, %v1604, 0.0
        %1625 = vadd.xlane.f32.xlu0 %v1624
        %v1626 = vpop.xlane.xlu0 %1625
        %v1627 = vsel %vm617, %v1606, 0.0
        %1628 = vadd.xlane.f32.xlu0 %v1627
        %v1629 = vpop.xlane.xlu0 %1628
        %v1630 = vsel %vm617, %v1608, 0.0
        %1631 = vadd.xlane.f32.xlu0 %v1630
        %v1632 = vpop.xlane.xlu0 %1631
        %v1633 = vsel %vm617, %v1610, 0.0
        %1634 = vadd.xlane.f32.xlu0 %v1633
        %v1635 = vpop.xlane.xlu0 %1634
        %v1636 = vsel %vm617, %v1612, 0.0
        %1637 = vadd.xlane.f32.xlu0 %v1636
        %v1638 = vpop.xlane.xlu0 %1637
        %v1639 = vsel %vm617, %v1614, 0.0
        %1640 = vadd.xlane.f32.xlu0 %v1639
        %v1641 = vpop.xlane.xlu0 %1640
        %v1642 = vsel %vm617, %v1616, 0.0
        %1643 = vadd.xlane.f32.xlu0 %v1642
        %v1644 = vpop.xlane.xlu0 %1643
        %v1645 = vmul.f32 %v1626, %v639
        %v1646 = vmul.f32 %v1629, %v639
        %v1647 = vmul.f32 %v1632, %v639
        %v1648 = vmul.f32 %v1635, %v639
        %v1649 = vmul.f32 %v1638, %v639
        %v1650 = vmul.f32 %v1641, %v639
        %v1651 = vmul.f32 %v1644, %v639
        %v1652 = vmul.f32 %v1582, %v1582
        %v1653 = vmul.f32 %v1583, %v1583
        %v1654 = vmul.f32 %v1584, %v1584
        %v1655 = vmul.f32 %v1585, %v1585
        %v1656 = vmul.f32 %v1586, %v1586
        %v1657 = vmul.f32 %v1587, %v1587
        %v1658 = vmul.f32 %v1588, %v1588
        %v1659 = vsub.f32 %v1645, %v1652
        %v1660 = vsub.f32 %v1646, %v1653
        %v1661 = vsub.f32 %v1647, %v1654
        %v1662 = vsub.f32 %v1648, %v1655
        %v1663 = vsub.f32 %v1649, %v1656
        %v1664 = vsub.f32 %v1650, %v1657
        %v1665 = vsub.f32 %v1651, %v1658
        %v1666 = vmax.f32 %v1659, 0.0
        %v1667 = vmax.f32 %v1660, 0.0
        %v1668 = vmax.f32 %v1661, 0.0
        %v1669 = vmax.f32 %v1662, 0.0
        %v1670 = vmax.f32 %v1663, 0.0
        %v1671 = vmax.f32 %v1664, 0.0
        %v1672 = vmax.f32 %v1665, 0.0
        %v1673 = vsub.f32 %v1524, %v1582
        %v1674 = vsub.f32 %v1525, %v1583
        %v1675 = vsub.f32 %v1526, %v1584
        %v1676 = vsub.f32 %v1527, %v1585
        %v1677 = vsub.f32 %v1528, %v1586
        %v1678 = vsub.f32 %v1529, %v1587
        %v1679 = vsub.f32 %v1530, %v1588
        %v1680 = vadd.f32 %v1666, 1e-05
        %v1681 = vadd.f32 %v1667, 1e-05
        %v1682 = vadd.f32 %v1668, 1e-05
        %v1683 = vadd.f32 %v1669, 1e-05
        %v1684 = vadd.f32 %v1670, 1e-05
        %v1685 = vadd.f32 %v1671, 1e-05
        %v1686 = vadd.f32 %v1672, 1e-05
        %v1687 = vrsqrt.pop %v1680
        %v1688 = vrsqrt.pop %v1681
        %v1689 = vrsqrt.pop %v1682
        %v1690 = vrsqrt.pop %v1683
        %v1691 = vrsqrt.pop %v1684
        %v1692 = vrsqrt.pop %v1685
        %v1693 = vrsqrt.pop %v1686
        %v1694 = vmul.f32 %v1673, %v1687
        %v1695 = vmul.f32 %v1674, %v1688
        %v1696 = vmul.f32 %v1675, %v1689
        %v1697 = vmul.f32 %v1676, %v1690
        %v1698 = vmul.f32 %v1677, %v1691
        %v1699 = vmul.f32 %v1678, %v1692
        %v1700 = vmul.f32 %v1679, %v1693
        %v1701 = vlaneseq
        %v1702 = vshrl.u32 %v1701, 7
        %v1703 = vsub.s32 0, %v1702
        %v1704 = vrot.slane %v1531, %v1703
        %1706 = vrot.lane.b32.xlu0 %v1704, 32
        %v1707 = vpop.permute.xlu0 %1706
        %v1709 = vmul.f32 %v1694, %v1707
        %v1710 = vmul.f32 %v1695, %v1707
        %v1711 = vmul.f32 %v1696, %v1707
        %v1712 = vmul.f32 %v1697, %v1707
        %v1713 = vmul.f32 %v1698, %v1707
        %v1714 = vmul.f32 %v1699, %v1707
        %v1715 = vmul.f32 %v1700, %v1707
        %v1716 = vlaneseq
        %v1717 = vshrl.u32 %v1716, 7
        %v1718 = vsub.s32 0, %v1717
        %v1719 = vrot.slane %v1532, %v1718
        %1721 = vrot.lane.b32.xlu0 %v1719, 32
        %v1722 = vpop.permute.xlu0 %1721
        %v1724 = vadd.f32 %v1709, %v1722
        %v1725 = vadd.f32 %v1710, %v1722
        %v1726 = vadd.f32 %v1711, %v1722
        %v1727 = vadd.f32 %v1712, %v1722
        %v1728 = vadd.f32 %v1713, %v1722
        %v1729 = vadd.f32 %v1714, %v1722
        %v1730 = vadd.f32 %v1715, %v1722
        %v1731 = vld [vmem:[%s4 + $0x90] sm:$0xff]
        %v1732 = vld [vmem:[%s4 + $0x98] sm:$0xff]
        %v1733 = vld [vmem:[%s4 + $0xa0] sm:$0xff]
        %v1734 = vld [vmem:[%s4 + $0xa8] sm:$0xff]
        %v1735 = vld [vmem:[%s4 + $0xb0] sm:$0xff]
        %v1736 = vld [vmem:[%s4 + $0xb8] sm:$0xff]
        %v1737 = vld [vmem:[%s4 + $0xc0] sm:$0xff]
        %v1738 = vld [vmem:[%s4 + $0xc8] sm:$0xff]
        %v1739 = vld [vmem:[%s4 + $0xd0] sm:$0xff]
        %v1740 = vld [vmem:[%s4 + $0xd8] sm:$0xff]
        %v1741 = vld [vmem:[%s4 + $0xe0] sm:$0xff]
        %v1742 = vld [vmem:[%s4 + $0xe8] sm:$0xff]
        %v1743 = vld [vmem:[%s4 + $0xf0] sm:$0xff]
        %v1744 = vld [vmem:[%s4 + $0xf8] sm:$0xff]
        %v1745 = vld [vmem:[%s4 + $0x100] sm:$0xff]
        %v1746 = vld [vmem:[%s4 + $0x108] sm:$0xff]
        %v1747 = vld [vmem:[%s4 + $0xc] sm:$0x1]
        %v1748 = vlaneseq
        %v1749 = vshrl.u32 %v1748, 7
        %v1750 = vsub.s32 0, %v1749
        %v1751 = vrot.slane %v1747, %v1750
        %1752 = vmatprep.subr.mxu0 0.0
        %1753 = vmatpush1.msra.mxu0 %v1746
        %1754 = vmatprep.subr.mxu0 0.0
        %1755 = vmatpush1.msra.mxu0 %v1745
        %1756 = vmatprep.subr.mxu0 0.0
        %1757 = vmatpush1.msra.mxu0 %v1744
        %1758 = vmatprep.subr.mxu0 0.0
        %1759 = vmatpush1.msra.mxu0 %v1743
        %1760 = vmatprep.subr.mxu0 0.0
        %1761 = vmatpush1.msra.mxu0 %v1742
        %1762 = vmatprep.subr.mxu0 0.0
        %1763 = vmatpush1.msra.mxu0 %v1741
        %1764 = vmatprep.subr.mxu0 0.0
        %1765 = vmatpush1.msra.mxu0 %v1740
        %1766 = vmatprep.subr.mxu0 0.0
        %1767 = vmatpush1.msra.mxu0 %v1739
        %1768 = vmatprep.subr.mxu0 0.0
        %1769 = vmatpush1.msra.mxu0 %v1738
        %1770 = vmatprep.subr.mxu0 0.0
        %1771 = vmatpush1.msra.mxu0 %v1737
        %1772 = vmatprep.subr.mxu0 0.0
        %1773 = vmatpush1.msra.mxu0 %v1736
        %1774 = vmatprep.subr.mxu0 0.0
        %1775 = vmatpush1.msra.mxu0 %v1735
        %1776 = vmatprep.subr.mxu0 0.0
        %1777 = vmatpush1.msra.mxu0 %v1734
        %1778 = vmatprep.subr.mxu0 0.0
        %1779 = vmatpush1.msra.mxu0 %v1733
        %1780 = vmatprep.subr.mxu0 0.0
        %1781 = vmatpush1.msra.mxu0 %v1732
        %1782 = vmatprep.subr.mxu0 0.0
        %1783 = vmatpush1.msra.mxu0 %v1731
        %1784 = vmatprep.subr.mxu0 0.0
        %1785 = vmatpush2.msra.mxu0 0.0
        %1786 = vmatprep.subr.mxu0 0.0
        %1787 = vmatpush2.msra.mxu0 0.0
        %1788 = vmatprep.subr.mxu0 0.0
        %1789 = vmatpush2.msra.mxu0 0.0
        %1790 = vmatprep.subr.mxu0 0.0
        %1791 = vmatpush2.msra.mxu0 0.0
        %1792 = vmatprep.subr.mxu0 0.0
        %1793 = vmatpush2.msra.mxu0 0.0
        %1794 = vmatprep.subr.mxu0 0.0
        %1795 = vmatpush2.msra.mxu0 0.0
        %1796 = vmatprep.subr.mxu0 0.0
        %1797 = vmatpush2.msra.mxu0 0.0
        %1798 = vmatprep.subr.mxu0 0.0
        %1799 = vmatpush2.msra.mxu0 0.0
        %1800 = vmatprep.subr.mxu0 0.0
        %1801 = vmatpush2.msra.mxu0 0.0
        %1802 = vmatprep.subr.mxu0 0.0
        %1803 = vmatpush2.msra.mxu0 0.0
        %1804 = vmatprep.subr.mxu0 0.0
        %1805 = vmatpush2.msra.mxu0 0.0
        %1806 = vmatprep.subr.mxu0 0.0
        %1807 = vmatpush2.msra.mxu0 0.0
        %1808 = vmatprep.subr.mxu0 0.0
        %1809 = vmatpush2.msra.mxu0 0.0
        %1810 = vmatprep.subr.mxu0 0.0
        %1811 = vmatpush2.msra.mxu0 0.0
        %1812 = vmatprep.subr.mxu0 0.0
        %1813 = vmatpush2.msra.mxu0 0.0
        %1814 = vmatprep.subr.mxu0 0.0
        %1815 = vmatpush2.msra.mxu0 0.0
        %1816 = vmatprep.mubr.f32.mxu0 0.0
        %1817 = vmatmul.mubr.f32.gmra.mxu0 %v334
        %v1818 = vpop.f32.mrf.mxu0
        %v1819 = vadd.f32 %v1751, %v1818
        %v1820 = vpop.f32.mrf.mxu0
        %1821 = vmatprep.mubr.f32.mxu0 0.0
        %1822 = vmatmul.mubr.f32.gmra.mxu0 %v335
        %v1823 = vpop.f32.mrf.mxu0
        %v1824 = vadd.f32 %v1751, %v1823
        %v1825 = vpop.f32.mrf.mxu0
        %1826 = vmatprep.mubr.f32.mxu0 0.0
        %1827 = vmatmul.mubr.f32.gmra.mxu0 %v336
        %v1828 = vpop.f32.mrf.mxu0
        %v1829 = vadd.f32 %v1751, %v1828
        %v1830 = vpop.f32.mrf.mxu0
        %1831 = vmatprep.mubr.f32.mxu0 0.0
        %1832 = vmatmul.mubr.f32.gmra.mxu0 %v337
        %v1833 = vpop.f32.mrf.mxu0
        %v1834 = vadd.f32 %v1751, %v1833
        %v1835 = vpop.f32.mrf.mxu0
        %1836 = vmatprep.mubr.f32.mxu0 0.0
        %1837 = vmatmul.mubr.f32.gmra.mxu0 %v338
        %v1838 = vpop.f32.mrf.mxu0
        %v1839 = vadd.f32 %v1751, %v1838
        %v1840 = vpop.f32.mrf.mxu0
        %1841 = vmatprep.mubr.f32.mxu0 0.0
        %1842 = vmatmul.mubr.f32.gmra.mxu0 %v339
        %v1843 = vpop.f32.mrf.mxu0
        %v1844 = vadd.f32 %v1751, %v1843
        %v1845 = vpop.f32.mrf.mxu0
        %1846 = vmatprep.mubr.f32.mxu0 0.0
        %1847 = vmatmul.mubr.f32.gmra.mxu0 %v340
        %v1848 = vpop.f32.mrf.mxu0
        %v1849 = vadd.f32 %v1751, %v1848
        %v1850 = vpop.f32.mrf.mxu0
        %1851 = vdwg.mxu0
        %v1852 = vmax.f32 %v1819, 0.0
        %v1853 = vmax.f32 %v1824, 0.0
        %v1854 = vmax.f32 %v1829, 0.0
        %v1855 = vmax.f32 %v1834, 0.0
        %v1856 = vmax.f32 %v1839, 0.0
        %v1857 = vmax.f32 %v1844, 0.0
        %v1858 = vmax.f32 %v1849, 0.0
        %v1859 = vld [vmem:[%s4 + $0x110] sm:$0xff]
        %v1860 = vld [vmem:[%s4 + $0x118] sm:$0xff]
        %v1861 = vld [vmem:[%s4 + $0x120] sm:$0xff]
        %v1862 = vld [vmem:[%s4 + $0x128] sm:$0xff]
        %v1863 = vld [vmem:[%s4 + $0xd] sm:$0x1]
        %v1864 = vlaneseq
        %v1865 = vshrl.u32 %v1864, 7
        %v1866 = vsub.s32 0, %v1865
        %v1867 = vrot.slane %v1863, %v1866
        %v1869 = vsel %vm617, %v1852, 0
        %v1872 = vsel %vm617, %v1853, 0
        %v1875 = vsel %vm617, %v1854, 0
        %v1878 = vsel %vm617, %v1855, 0
        %v1881 = vsel %vm617, %v1856, 0
        %v1884 = vsel %vm617, %v1857, 0
        %v1887 = vsel %vm617, %v1858, 0
        %1889 = vmatprep.subr.mxu0 0.0
        %1890 = vmatpush1.msra.mxu0 0.0
        %1891 = vmatprep.subr.mxu0 0.0
        %1892 = vmatpush1.msra.mxu0 0.0
        %1893 = vmatprep.subr.mxu0 0.0
        %1894 = vmatpush1.msra.mxu0 0.0
        %1895 = vmatprep.subr.mxu0 0.0
        %1896 = vmatpush1.msra.mxu0 0.0
        %1897 = vmatprep.subr.mxu0 0.0
        %1898 = vmatpush1.msra.mxu0 0.0
        %1899 = vmatprep.subr.mxu0 0.0
        %1900 = vmatpush1.msra.mxu0 0.0
        %1901 = vmatprep.subr.mxu0 0.0
        %1902 = vmatpush1.msra.mxu0 0.0
        %1903 = vmatprep.subr.mxu0 0.0
        %1904 = vmatpush1.msra.mxu0 0.0
        %1905 = vmatprep.subr.mxu0 0.0
        %1906 = vmatpush1.msra.mxu0 0.0
        %1907 = vmatprep.subr.mxu0 0.0
        %1908 = vmatpush1.msra.mxu0 0.0
        %1909 = vmatprep.subr.mxu0 0.0
        %1910 = vmatpush1.msra.mxu0 0.0
        %1911 = vmatprep.subr.mxu0 0.0
        %1912 = vmatpush1.msra.mxu0 0.0
        %1913 = vmatprep.subr.mxu0 0.0
        %1914 = vmatpush1.msra.mxu0 %v1862
        %1915 = vmatprep.subr.mxu0 0.0
        %1916 = vmatpush1.msra.mxu0 %v1861
        %1917 = vmatprep.subr.mxu0 0.0
        %1918 = vmatpush1.msra.mxu0 %v1860
        %1919 = vmatprep.subr.mxu0 0.0
        %1920 = vmatpush1.msra.mxu0 %v1859
        %1921 = vmatprep.subr.mxu0 0.0
        %1922 = vmatpush2.msra.mxu0 0.0
        %1923 = vmatprep.subr.mxu0 0.0
        %1924 = vmatpush2.msra.mxu0 0.0
        %1925 = vmatprep.subr.mxu0 0.0
        %1926 = vmatpush2.msra.mxu0 0.0
        %1927 = vmatprep.subr.mxu0 0.0
        %1928 = vmatpush2.msra.mxu0 0.0
        %1929 = vmatprep.subr.mxu0 0.0
        %1930 = vmatpush2.msra.mxu0 0.0
        %1931 = vmatprep.subr.mxu0 0.0
        %1932 = vmatpush2.msra.mxu0 0.0
        %1933 = vmatprep.subr.mxu0 0.0
        %1934 = vmatpush2.msra.mxu0 0.0
        %1935 = vmatprep.subr.mxu0 0.0
        %1936 = vmatpush2.msra.mxu0 0.0
        %1937 = vmatprep.subr.mxu0 0.0
        %1938 = vmatpush2.msra.mxu0 0.0
        %1939 = vmatprep.subr.mxu0 0.0
        %1940 = vmatpush2.msra.mxu0 0.0
        %1941 = vmatprep.subr.mxu0 0.0
        %1942 = vmatpush2.msra.mxu0 0.0
        %1943 = vmatprep.subr.mxu0 0.0
        %1944 = vmatpush2.msra.mxu0 0.0
        %1945 = vmatprep.subr.mxu0 0.0
        %1946 = vmatpush2.msra.mxu0 0.0
        %1947 = vmatprep.subr.mxu0 0.0
        %1948 = vmatpush2.msra.mxu0 0.0
        %1949 = vmatprep.subr.mxu0 0.0
        %1950 = vmatpush2.msra.mxu0 0.0
        %1951 = vmatprep.subr.mxu0 0.0
        %1952 = vmatpush2.msra.mxu0 0.0
        %1953 = vmatprep.mubr.f32.mxu0 0.0
        %1954 = vmatmul.mubr.f32.gmra.mxu0 %v1869
        %v1955 = vpop.f32.mrf.mxu0
        %v1956 = vadd.f32 %v1867, %v1955
        %v1957 = vpop.f32.mrf.mxu0
        %1958 = vmatprep.mubr.f32.mxu0 0.0
        %1959 = vmatmul.mubr.f32.gmra.mxu0 %v1872
        %v1960 = vpop.f32.mrf.mxu0
        %v1961 = vadd.f32 %v1867, %v1960
        %v1962 = vpop.f32.mrf.mxu0
        %1963 = vmatprep.mubr.f32.mxu0 0.0
        %1964 = vmatmul.mubr.f32.gmra.mxu0 %v1875
        %v1965 = vpop.f32.mrf.mxu0
        %v1966 = vadd.f32 %v1867, %v1965
        %v1967 = vpop.f32.mrf.mxu0
        %1968 = vmatprep.mubr.f32.mxu0 0.0
        %1969 = vmatmul.mubr.f32.gmra.mxu0 %v1878
        %v1970 = vpop.f32.mrf.mxu0
        %v1971 = vadd.f32 %v1867, %v1970
        %v1972 = vpop.f32.mrf.mxu0
        %1973 = vmatprep.mubr.f32.mxu0 0.0
        %1974 = vmatmul.mubr.f32.gmra.mxu0 %v1881
        %v1975 = vpop.f32.mrf.mxu0
        %v1976 = vadd.f32 %v1867, %v1975
        %v1977 = vpop.f32.mrf.mxu0
        %1978 = vmatprep.mubr.f32.mxu0 0.0
        %1979 = vmatmul.mubr.f32.gmra.mxu0 %v1884
        %v1980 = vpop.f32.mrf.mxu0
        %v1981 = vadd.f32 %v1867, %v1980
        %v1982 = vpop.f32.mrf.mxu0
        %1983 = vmatprep.mubr.f32.mxu0 0.0
        %1984 = vmatmul.mubr.f32.gmra.mxu0 %v1887
        %v1985 = vpop.f32.mrf.mxu0
        %v1986 = vadd.f32 %v1867, %v1985
        %v1987 = vpop.f32.mrf.mxu0
        %1988 = vdwg.mxu0
        %v1989 = vld [vmem:[%s4 + $0x130] sm:$0xff]
        %v1990 = vld [vmem:[%s4 + $0x138] sm:$0xff]
        %v1991 = vld [vmem:[%s4 + $0x140] sm:$0xff]
        %v1992 = vld [vmem:[%s4 + $0x148] sm:$0xff]
        %v1993 = vld [vmem:[%s4 + $0x150] sm:$0xff]
        %v1994 = vld [vmem:[%s4 + $0x158] sm:$0xff]
        %v1995 = vld [vmem:[%s4 + $0x160] sm:$0xff]
        %v1996 = vld [vmem:[%s4 + $0x168] sm:$0xff]
        %v1998 = vsel %vm617, %v1956, 0
        %v2001 = vsel %vm617, %v1961, 0
        %v2004 = vsel %vm617, %v1966, 0
        %v2007 = vsel %vm617, %v1971, 0
        %v2010 = vsel %vm617, %v1976, 0
        %v2013 = vsel %vm617, %v1981, 0
        %v2016 = vsel %vm617, %v1986, 0
        %2018 = vmatprep.subr.mxu0 0.0
        %2019 = vmatpush1.msra.mxu0 0.0
        %2020 = vmatprep.subr.mxu0 0.0
        %2021 = vmatpush1.msra.mxu0 0.0
        %2022 = vmatprep.subr.mxu0 0.0
        %2023 = vmatpush1.msra.mxu0 0.0
        %2024 = vmatprep.subr.mxu0 0.0
        %2025 = vmatpush1.msra.mxu0 0.0
        %2026 = vmatprep.subr.mxu0 0.0
        %2027 = vmatpush1.msra.mxu0 0.0
        %2028 = vmatprep.subr.mxu0 0.0
        %2029 = vmatpush1.msra.mxu0 0.0
        %2030 = vmatprep.subr.mxu0 0.0
        %2031 = vmatpush1.msra.mxu0 0.0
        %2032 = vmatprep.subr.mxu0 0.0
        %2033 = vmatpush1.msra.mxu0 0.0
        %2034 = vmatprep.subr.mxu0 0.0
        %2035 = vmatpush1.msra.mxu0 0.0
        %2036 = vmatprep.subr.mxu0 0.0
        %2037 = vmatpush1.msra.mxu0 0.0
        %2038 = vmatprep.subr.mxu0 0.0
        %2039 = vmatpush1.msra.mxu0 0.0
        %2040 = vmatprep.subr.mxu0 0.0
        %2041 = vmatpush1.msra.mxu0 0.0
        %2042 = vmatprep.subr.mxu0 0.0
        %2043 = vmatpush1.msra.mxu0 %v1996
        %2044 = vmatprep.subr.mxu0 0.0
        %2045 = vmatpush1.msra.mxu0 %v1995
        %2046 = vmatprep.subr.mxu0 0.0
        %2047 = vmatpush1.msra.mxu0 %v1994
        %2048 = vmatprep.subr.mxu0 0.0
        %2049 = vmatpush1.msra.mxu0 %v1993
        %2050 = vmatprep.subr.mxu0 0.0
        %2051 = vmatpush2.msra.mxu0 0.0
        %2052 = vmatprep.subr.mxu0 0.0
        %2053 = vmatpush2.msra.mxu0 0.0
        %2054 = vmatprep.subr.mxu0 0.0
        %2055 = vmatpush2.msra.mxu0 0.0
        %2056 = vmatprep.subr.mxu0 0.0
        %2057 = vmatpush2.msra.mxu0 0.0
        %2058 = vmatprep.subr.mxu0 0.0
        %2059 = vmatpush2.msra.mxu0 0.0
        %2060 = vmatprep.subr.mxu0 0.0
        %2061 = vmatpush2.msra.mxu0 0.0
        %2062 = vmatprep.subr.mxu0 0.0
        %2063 = vmatpush2.msra.mxu0 0.0
        %2064 = vmatprep.subr.mxu0 0.0
        %2065 = vmatpush2.msra.mxu0 0.0
        %2066 = vmatprep.subr.mxu0 0.0
        %2067 = vmatpush2.msra.mxu0 0.0
        %2068 = vmatprep.subr.mxu0 0.0
        %2069 = vmatpush2.msra.mxu0 0.0
        %2070 = vmatprep.subr.mxu0 0.0
        %2071 = vmatpush2.msra.mxu0 0.0
        %2072 = vmatprep.subr.mxu0 0.0
        %2073 = vmatpush2.msra.mxu0 0.0
        %2074 = vmatprep.subr.mxu0 0.0
        %2075 = vmatpush2.msra.mxu0 0.0
        %2076 = vmatprep.subr.mxu0 0.0
        %2077 = vmatpush2.msra.mxu0 0.0
        %2078 = vmatprep.subr.mxu0 0.0
        %2079 = vmatpush2.msra.mxu0 0.0
        %2080 = vmatprep.subr.mxu0 0.0
        %2081 = vmatpush2.msra.mxu0 0.0
        %2082 = vmatprep.mubr.f32.mxu0 0.0
        %2083 = vmatmul.mubr.f32.gmra.mxu0 %v1998
        %v2084 = vpop.f32.mrf.mxu0
        %v2085 = vadd.f32 0.0, %v2084
        %v2086 = vpop.f32.mrf.mxu0
        %2087 = vmatprep.mubr.f32.mxu0 0.0
        %2088 = vmatmul.mubr.f32.gmra.mxu0 %v2001
        %v2089 = vpop.f32.mrf.mxu0
        %v2090 = vadd.f32 0.0, %v2089
        %v2091 = vpop.f32.mrf.mxu0
        %2092 = vmatprep.mubr.f32.mxu0 0.0
        %2093 = vmatmul.mubr.f32.gmra.mxu0 %v2004
        %v2094 = vpop.f32.mrf.mxu0
        %v2095 = vadd.f32 0.0, %v2094
        %v2096 = vpop.f32.mrf.mxu0
        %2097 = vmatprep.mubr.f32.mxu0 0.0
        %2098 = vmatmul.mubr.f32.gmra.mxu0 %v2007
        %v2099 = vpop.f32.mrf.mxu0
        %v2100 = vadd.f32 0.0, %v2099
        %v2101 = vpop.f32.mrf.mxu0
        %2102 = vmatprep.mubr.f32.mxu0 0.0
        %2103 = vmatmul.mubr.f32.gmra.mxu0 %v2010
        %v2104 = vpop.f32.mrf.mxu0
        %v2105 = vadd.f32 0.0, %v2104
        %v2106 = vpop.f32.mrf.mxu0
        %2107 = vmatprep.mubr.f32.mxu0 0.0
        %2108 = vmatmul.mubr.f32.gmra.mxu0 %v2013
        %v2109 = vpop.f32.mrf.mxu0
        %v2110 = vadd.f32 0.0, %v2109
        %v2111 = vpop.f32.mrf.mxu0
        %2112 = vmatprep.mubr.f32.mxu0 0.0
        %2113 = vmatmul.mubr.f32.gmra.mxu0 %v2016
        %v2114 = vpop.f32.mrf.mxu0
        %v2115 = vadd.f32 0.0, %v2114
        %v2116 = vpop.f32.mrf.mxu0
        %2117 = vdwg.mxu0
        %2125 = vrot.lane.b32.xlu0 %v1724, 96
        %v2126 = vpop.permute.xlu0 %2125
        %2127 = vrot.lane.b32.xlu0 %v1725, 96
        %v2128 = vpop.permute.xlu0 %2127
        %2129 = vrot.lane.b32.xlu0 %v1726, 96
        %v2130 = vpop.permute.xlu0 %2129
        %2131 = vrot.lane.b32.xlu0 %v1727, 96
        %v2132 = vpop.permute.xlu0 %2131
        %2133 = vrot.lane.b32.xlu0 %v1728, 96
        %v2134 = vpop.permute.xlu0 %2133
        %2135 = vrot.lane.b32.xlu0 %v1729, 96
        %v2136 = vpop.permute.xlu0 %2135
        %2137 = vrot.lane.b32.xlu0 %v1730, 96
        %v2138 = vpop.permute.xlu0 %2137
        %v2139 = vsel %vm617, %v2126, 0
        %v2141 = vsel %vm617, %v2128, 0
        %v2143 = vsel %vm617, %v2130, 0
        %v2145 = vsel %vm617, %v2132, 0
        %v2147 = vsel %vm617, %v2134, 0
        %v2149 = vsel %vm617, %v2136, 0
        %v2151 = vsel %vm617, %v2138, 0
        %2153 = vmatprep.subr.mxu0 0.0
        %2154 = vmatpush1.msra.mxu0 0.0
        %2155 = vmatprep.subr.mxu0 0.0
        %2156 = vmatpush1.msra.mxu0 0.0
        %2157 = vmatprep.subr.mxu0 0.0
        %2158 = vmatpush1.msra.mxu0 0.0
        %2159 = vmatprep.subr.mxu0 0.0
        %2160 = vmatpush1.msra.mxu0 0.0
        %2161 = vmatprep.subr.mxu0 0.0
        %2162 = vmatpush1.msra.mxu0 0.0
        %2163 = vmatprep.subr.mxu0 0.0
        %2164 = vmatpush1.msra.mxu0 0.0
        %2165 = vmatprep.subr.mxu0 0.0
        %2166 = vmatpush1.msra.mxu0 0.0
        %2167 = vmatprep.subr.mxu0 0.0
        %2168 = vmatpush1.msra.mxu0 0.0
        %2169 = vmatprep.subr.mxu0 0.0
        %2170 = vmatpush1.msra.mxu0 0.0
        %2171 = vmatprep.subr.mxu0 0.0
        %2172 = vmatpush1.msra.mxu0 0.0
        %2173 = vmatprep.subr.mxu0 0.0
        %2174 = vmatpush1.msra.mxu0 0.0
        %2175 = vmatprep.subr.mxu0 0.0
        %2176 = vmatpush1.msra.mxu0 0.0
        %2177 = vmatprep.subr.mxu0 0.0
        %2178 = vmatpush1.msra.mxu0 %v1992
        %2179 = vmatprep.subr.mxu0 0.0
        %2180 = vmatpush1.msra.mxu0 %v1991
        %2181 = vmatprep.subr.mxu0 0.0
        %2182 = vmatpush1.msra.mxu0 %v1990
        %2183 = vmatprep.subr.mxu0 0.0
        %2184 = vmatpush1.msra.mxu0 %v1989
        %2185 = vmatprep.subr.mxu0 0.0
        %2186 = vmatpush2.msra.mxu0 0.0
        %2187 = vmatprep.subr.mxu0 0.0
        %2188 = vmatpush2.msra.mxu0 0.0
        %2189 = vmatprep.subr.mxu0 0.0
        %2190 = vmatpush2.msra.mxu0 0.0
        %2191 = vmatprep.subr.mxu0 0.0
        %2192 = vmatpush2.msra.mxu0 0.0
        %2193 = vmatprep.subr.mxu0 0.0
        %2194 = vmatpush2.msra.mxu0 0.0
        %2195 = vmatprep.subr.mxu0 0.0
        %2196 = vmatpush2.msra.mxu0 0.0
        %2197 = vmatprep.subr.mxu0 0.0
        %2198 = vmatpush2.msra.mxu0 0.0
        %2199 = vmatprep.subr.mxu0 0.0
        %2200 = vmatpush2.msra.mxu0 0.0
        %2201 = vmatprep.subr.mxu0 0.0
        %2202 = vmatpush2.msra.mxu0 0.0
        %2203 = vmatprep.subr.mxu0 0.0
        %2204 = vmatpush2.msra.mxu0 0.0
        %2205 = vmatprep.subr.mxu0 0.0
        %2206 = vmatpush2.msra.mxu0 0.0
        %2207 = vmatprep.subr.mxu0 0.0
        %2208 = vmatpush2.msra.mxu0 0.0
        %2209 = vmatprep.subr.mxu0 0.0
        %2210 = vmatpush2.msra.mxu0 0.0
        %2211 = vmatprep.subr.mxu0 0.0
        %2212 = vmatpush2.msra.mxu0 0.0
        %2213 = vmatprep.subr.mxu0 0.0
        %2214 = vmatpush2.msra.mxu0 0.0
        %2215 = vmatprep.subr.mxu0 0.0
        %2216 = vmatpush2.msra.mxu0 0.0
        %2217 = vmatprep.mubr.f32.mxu0 0.0
        %2218 = vmatmul.mubr.f32.gmra.mxu0 %v2139
        %v2219 = vpop.f32.mrf.mxu0
        %v2220 = vadd.f32 %v2085, %v2219
        %v2221 = vpop.f32.mrf.mxu0
        %2222 = vmatprep.mubr.f32.mxu0 0.0
        %2223 = vmatmul.mubr.f32.gmra.mxu0 %v2141
        %v2224 = vpop.f32.mrf.mxu0
        %v2225 = vadd.f32 %v2090, %v2224
        %v2226 = vpop.f32.mrf.mxu0
        %2227 = vmatprep.mubr.f32.mxu0 0.0
        %2228 = vmatmul.mubr.f32.gmra.mxu0 %v2143
        %v2229 = vpop.f32.mrf.mxu0
        %v2230 = vadd.f32 %v2095, %v2229
        %v2231 = vpop.f32.mrf.mxu0
        %2232 = vmatprep.mubr.f32.mxu0 0.0
        %2233 = vmatmul.mubr.f32.gmra.mxu0 %v2145
        %v2234 = vpop.f32.mrf.mxu0
        %v2235 = vadd.f32 %v2100, %v2234
        %v2236 = vpop.f32.mrf.mxu0
        %2237 = vmatprep.mubr.f32.mxu0 0.0
        %2238 = vmatmul.mubr.f32.gmra.mxu0 %v2147
        %v2239 = vpop.f32.mrf.mxu0
        %v2240 = vadd.f32 %v2105, %v2239
        %v2241 = vpop.f32.mrf.mxu0
        %2242 = vmatprep.mubr.f32.mxu0 0.0
        %2243 = vmatmul.mubr.f32.gmra.mxu0 %v2149
        %v2244 = vpop.f32.mrf.mxu0
        %v2245 = vadd.f32 %v2110, %v2244
        %v2246 = vpop.f32.mrf.mxu0
        %2247 = vmatprep.mubr.f32.mxu0 0.0
        %2248 = vmatmul.mubr.f32.gmra.mxu0 %v2151
        %v2249 = vpop.f32.mrf.mxu0
        %v2250 = vadd.f32 %v2115, %v2249
        %v2251 = vpop.f32.mrf.mxu0
        %2252 = vdwg.mxu0
        %v2253 = vld [vmem:[%s4 + $0xe] sm:$0x1]
        %v2254 = vlaneseq
        %v2255 = vshrl.u32 %v2254, 7
        %v2256 = vsub.s32 0, %v2255
        %v2257 = vrot.slane %v2253, %v2256
        %v2258 = vadd.f32 %v2220, %v2257
        %v2259 = vadd.f32 %v2225, %v2257
        %v2260 = vadd.f32 %v2230, %v2257
        %v2261 = vadd.f32 %v2235, %v2257
        %v2262 = vadd.f32 %v2240, %v2257
        %v2263 = vadd.f32 %v2245, %v2257
        %v2264 = vadd.f32 %v2250, %v2257
        %v2265 = vld [vmem:[%s4 + $0xf] sm:$0x1]
        %v2266 = vld [vmem:[%s4 + $0x10] sm:$0x1]
        %vm2267 = vcmask 392192
        %v2268 = vsel %vm2267, %v2258, 0.0
        %2269 = vadd.xlane.f32.xlu0 %v2268
        %v2270 = vpop.xlane.xlu0 %2269
        %v2271 = vsel %vm2267, %v2259, 0.0
        %2272 = vadd.xlane.f32.xlu0 %v2271
        %v2273 = vpop.xlane.xlu0 %2272
        %v2274 = vsel %vm2267, %v2260, 0.0
        %2275 = vadd.xlane.f32.xlu0 %v2274
        %v2276 = vpop.xlane.xlu0 %2275
        %v2277 = vsel %vm2267, %v2261, 0.0
        %2278 = vadd.xlane.f32.xlu0 %v2277
        %v2279 = vpop.xlane.xlu0 %2278
        %v2280 = vsel %vm2267, %v2262, 0.0
        %2281 = vadd.xlane.f32.xlu0 %v2280
        %v2282 = vpop.xlane.xlu0 %2281
        %v2283 = vsel %vm2267, %v2263, 0.0
        %2284 = vadd.xlane.f32.xlu0 %v2283
        %v2285 = vpop.xlane.xlu0 %2284
        %v2286 = vsel %vm2267, %v2264, 0.0
        %2287 = vadd.xlane.f32.xlu0 %v2286
        %v2288 = vpop.xlane.xlu0 %2287
        %v2289 = vrcp.pop 48.0
        %v2290 = vmul.f32 %v2270, %v2289
        %v2291 = vmul.f32 %v2273, %v2289
        %v2292 = vmul.f32 %v2276, %v2289
        %v2293 = vmul.f32 %v2279, %v2289
        %v2294 = vmul.f32 %v2282, %v2289
        %v2295 = vmul.f32 %v2285, %v2289
        %v2296 = vmul.f32 %v2288, %v2289
        %v2297 = vmul.f32 %v2258, %v2258
        %v2298 = vmul.f32 %v2259, %v2259
        %v2299 = vmul.f32 %v2260, %v2260
        %v2300 = vmul.f32 %v2261, %v2261
        %v2301 = vmul.f32 %v2262, %v2262
        %v2302 = vmul.f32 %v2263, %v2263
        %v2303 = vmul.f32 %v2264, %v2264
        %v2304 = vsel %vm2267, %v2297, 0.0
        %2305 = vadd.xlane.f32.xlu0 %v2304
        %v2306 = vpop.xlane.xlu0 %2305
        %v2307 = vsel %vm2267, %v2298, 0.0
        %2308 = vadd.xlane.f32.xlu0 %v2307
        %v2309 = vpop.xlane.xlu0 %2308
        %v2310 = vsel %vm2267, %v2299, 0.0
        %2311 = vadd.xlane.f32.xlu0 %v2310
        %v2312 = vpop.xlane.xlu0 %2311
        %v2313 = vsel %vm2267, %v2300, 0.0
        %2314 = vadd.xlane.f32.xlu0 %v2313
        %v2315 = vpop.xlane.xlu0 %2314
        %v2316 = vsel %vm2267, %v2301, 0.0
        %2317 = vadd.xlane.f32.xlu0 %v2316
        %v2318 = vpop.xlane.xlu0 %2317
        %v2319 = vsel %vm2267, %v2302, 0.0
        %2320 = vadd.xlane.f32.xlu0 %v2319
        %v2321 = vpop.xlane.xlu0 %2320
        %v2322 = vsel %vm2267, %v2303, 0.0
        %2323 = vadd.xlane.f32.xlu0 %v2322
        %v2324 = vpop.xlane.xlu0 %2323
        %v2325 = vmul.f32 %v2306, %v2289
        %v2326 = vmul.f32 %v2309, %v2289
        %v2327 = vmul.f32 %v2312, %v2289
        %v2328 = vmul.f32 %v2315, %v2289
        %v2329 = vmul.f32 %v2318, %v2289
        %v2330 = vmul.f32 %v2321, %v2289
        %v2331 = vmul.f32 %v2324, %v2289
        %v2332 = vmul.f32 %v2290, %v2290
        %v2333 = vmul.f32 %v2291, %v2291
        %v2334 = vmul.f32 %v2292, %v2292
        %v2335 = vmul.f32 %v2293, %v2293
        %v2336 = vmul.f32 %v2294, %v2294
        %v2337 = vmul.f32 %v2295, %v2295
        %v2338 = vmul.f32 %v2296, %v2296
        %v2339 = vsub.f32 %v2325, %v2332
        %v2340 = vsub.f32 %v2326, %v2333
        %v2341 = vsub.f32 %v2327, %v2334
        %v2342 = vsub.f32 %v2328, %v2335
        %v2343 = vsub.f32 %v2329, %v2336
        %v2344 = vsub.f32 %v2330, %v2337
        %v2345 = vsub.f32 %v2331, %v2338
        %v2346 = vmax.f32 %v2339, 0.0
        %v2347 = vmax.f32 %v2340, 0.0
        %v2348 = vmax.f32 %v2341, 0.0
        %v2349 = vmax.f32 %v2342, 0.0
        %v2350 = vmax.f32 %v2343, 0.0
        %v2351 = vmax.f32 %v2344, 0.0
        %v2352 = vmax.f32 %v2345, 0.0
        %v2353 = vsub.f32 %v2258, %v2290
        %v2354 = vsub.f32 %v2259, %v2291
        %v2355 = vsub.f32 %v2260, %v2292
        %v2356 = vsub.f32 %v2261, %v2293
        %v2357 = vsub.f32 %v2262, %v2294
        %v2358 = vsub.f32 %v2263, %v2295
        %v2359 = vsub.f32 %v2264, %v2296
        %v2360 = vadd.f32 %v2346, 1e-05
        %v2361 = vadd.f32 %v2347, 1e-05
        %v2362 = vadd.f32 %v2348, 1e-05
        %v2363 = vadd.f32 %v2349, 1e-05
        %v2364 = vadd.f32 %v2350, 1e-05
        %v2365 = vadd.f32 %v2351, 1e-05
        %v2366 = vadd.f32 %v2352, 1e-05
        %v2367 = vrsqrt.pop %v2360
        %v2368 = vrsqrt.pop %v2361
        %v2369 = vrsqrt.pop %v2362
        %v2370 = vrsqrt.pop %v2363
        %v2371 = vrsqrt.pop %v2364
        %v2372 = vrsqrt.pop %v2365
        %v2373 = vrsqrt.pop %v2366
        %v2374 = vmul.f32 %v2353, %v2367
        %v2375 = vmul.f32 %v2354, %v2368
        %v2376 = vmul.f32 %v2355, %v2369
        %v2377 = vmul.f32 %v2356, %v2370
        %v2378 = vmul.f32 %v2357, %v2371
        %v2379 = vmul.f32 %v2358, %v2372
        %v2380 = vmul.f32 %v2359, %v2373
        %v2381 = vlaneseq
        %v2382 = vshrl.u32 %v2381, 7
        %v2383 = vsub.s32 0, %v2382
        %v2384 = vrot.slane %v2265, %v2383
        %v2385 = vmul.f32 %v2374, %v2384
        %v2386 = vmul.f32 %v2375, %v2384
        %v2387 = vmul.f32 %v2376, %v2384
        %v2388 = vmul.f32 %v2377, %v2384
        %v2389 = vmul.f32 %v2378, %v2384
        %v2390 = vmul.f32 %v2379, %v2384
        %v2391 = vmul.f32 %v2380, %v2384
        %v2392 = vlaneseq
        %v2393 = vshrl.u32 %v2392, 7
        %v2394 = vsub.s32 0, %v2393
        %v2395 = vrot.slane %v2266, %v2394
        %v2396 = vadd.f32 %v2385, %v2395
        %v2397 = vadd.f32 %v2386, %v2395
        %v2398 = vadd.f32 %v2387, %v2395
        %v2399 = vadd.f32 %v2388, %v2395
        %v2400 = vadd.f32 %v2389, %v2395
        %v2401 = vadd.f32 %v2390, %v2395
        %v2402 = vadd.f32 %v2391, %v2395
        %2403 = vst.msk [vmem:[%s311] sm:$0xff] %vm2267, %v2396
        %2404 = vst.msk [vmem:[%s311 + $0x8] sm:$0xff] %vm2267, %v2397
        %2405 = vst.msk [vmem:[%s311 + $0x10] sm:$0xff] %vm2267, %v2398
        %2406 = vst.msk [vmem:[%s311 + $0x18] sm:$0xff] %vm2267, %v2399
        %2407 = vst.msk [vmem:[%s311 + $0x20] sm:$0xff] %vm2267, %v2400
        %2408 = vst.msk [vmem:[%s311 + $0x28] sm:$0xff] %vm2267, %v2401
        %2409 = vst.msk [vmem:[%s311 + $0x30] sm:$0xff] %vm2267, %v2402
        %s2410 = smul.u32 7, %s19
        %p2411 = scmp.lt.s32.totalorder %s2410, 13
        %s2412 = scalar_select %p2411, %s2410, 13
        %s2413 = smul.addr %s2412, 8
        %s2414 = scalar_lea.vmem %s5, %s2413
        // Predicated region
        $region45: #{tpu_custom_call.1} parent=39 // pred_check
          %p2415 = pneg %p162
        $region46: #{tpu_custom_call.1} parent=39 // pred_check_branch
          %2417 = sbr.rel (%p2415) target = $region48
        $region47: #{tpu_custom_call.1} parent=39 // pred_region
          %s2418 = smul.u32 7, %s19
        $region48: #{tpu_custom_call.1} parent=39 // pred_fallthru
          _
      $region40: #{tpu_custom_call.1} parent=5 // pred_fallthru
        _
      %p2419 = scmp.le.s32.totalorder 2, %s14
      // Predicated region
      $region49: #{tpu_custom_call.1} parent=5 // pred_check
        %p2420 = pneg %p2419
      $region50: #{tpu_custom_call.1} parent=5 // pred_check_branch
        %2422 = sbr.rel (%p2420) target = $region52
      $region51: #{tpu_custom_call.1} parent=5 // pred_region
        %s2423 = ssub.s32 %s14, 2
        // Predicated region
        $region53: #{tpu_custom_call.1} parent=51 // pred_check
          %p2424 = pneg %p168
        $region54: #{tpu_custom_call.1} parent=51 // pred_check_branch
          %2426 = sbr.rel (%p2424) target = $region56
        $region55: #{tpu_custom_call.1} parent=51 // pred_region
          %s2427 = smul.u32 7, %s20
          %p2428 = scmp.lt.s32.totalorder %s2427, 13
          %s2429 = scalar_select %p2428, %s2427, 13
          %s2430 = smul.addr %s2429, 8
          %s2431 = scalar_lea.vmem %s5, %s2430
        $region56: #{tpu_custom_call.1} parent=51 // pred_fallthru
          _
      $region52: #{tpu_custom_call.1} parent=5 // pred_fallthru
        _
    $region6: #{tpu_custom_call.1} parent=1 // loop_footer
      %s18 = sadd.s32 1, %s14
    $region7: #{tpu_custom_call.1} parent=1 // loop_footer_branch
      %13 = sbr.rel target = $region3
    $region8: #{tpu_custom_call.1} parent=1 // loop_exit
      _
    %2432 = vsyncpa [#allocation3], 1
    %s2433 = scalar_lea.sflag [#allocation3], 1
    %2434 = vsyncpa %s2433, 1

</llo_original>
